<compile_context>
chip_gen: v5e
topology: v5e:2x2
jax: 0.10.0
libtpu: 0.0.40
codegen_flags: <defaults>
</compile_context>

<pallas_src>
import functools

import jax
import jax.numpy as jnp
from jax.experimental import pallas as pl
from jax.experimental import pallas as _pl_unused  # keep namespace tidy; pltpu not needed (no grid / manual DMA)


# ----------------------------- shared math --------------------------------- #

def _layer_norm(t, g, b, eps=1e-5):
    mu = jnp.mean(t, axis=-1, keepdims=True)
    var = jnp.mean((t - mu) ** 2, axis=-1, keepdims=True)
    return (t - mu) * jax.lax.rsqrt(var + eps) * g + b


# ------------------------------- kernels ----------------------------------- #

def encoder_layer_kernel(x_ref, mask_ref, pe_ref,
                         wqkv_ref, bqkv_ref, wo_ref,
                         w1_ref, b1_ref, w2_ref, vec_ref,
                         o_ref, *, num_heads, embed_scale):
    """One BaseTransformerLayer over the whole batch in a single invocation."""
    B, S, D = x_ref.shape
    dh = D // num_heads
    inv_sqrt_dh = 1.0 / (dh ** 0.5)

    # Hoist all weight loads once (outside the static batch/head loops).
    vecs = vec_ref[...]                                   # (6, D)
    bo, g1, be1, b2, g2, be2 = (vecs[i:i + 1, :] for i in range(6))
    wqkv = wqkv_ref[...]                                  # (D, 3D)
    bqkv = bqkv_ref[...]                                  # (1, 3D)
    wo = wo_ref[...]                                      # (D, D)
    w1 = w1_ref[...]                                      # (D, Fd)
    b1 = b1_ref[...]                                      # (1, Fd)
    w2 = w2_ref[...]                                      # (Fd, D)
    pe = pe_ref[...]                                      # (S, D)

    for b in range(B):                                    # static unroll (B is tiny)
        # embedding * sqrt(d_model) + positional encoding, fused in-kernel.
        x = x_ref[b] * embed_scale + pe                   # (S, D)
        masked = mask_ref[b] == 0.0                       # (1, S) key-padding mask

        # Fused Q/K/V projection: one MXU push.
        qkv = jnp.dot(x, wqkv, preferred_element_type=jnp.float32) + bqkv  # (S, 3D)

        # Per-head attention, accumulating straight into the output projection
        # (no lane-dim concatenate).
        attn = jnp.zeros((S, D), jnp.float32)
        for h in range(num_heads):
            lo = h * dh
            qh = qkv[:, lo:lo + dh]
            kh = qkv[:, D + lo:D + lo + dh]
            vh = qkv[:, 2 * D + lo:2 * D + lo + dh]
            s = jnp.dot(qh, kh.T, preferred_element_type=jnp.float32) * inv_sqrt_dh
            s = jnp.where(masked, -1e9, s)                # (S, S)
            s = s - jnp.max(s, axis=-1, keepdims=True)
            p = jnp.exp(s)
            p = p * pl.reciprocal(jnp.sum(p, axis=-1, keepdims=True), approx=True)
            ctx = jnp.dot(p, vh, preferred_element_type=jnp.float32)       # (S, dh)
            attn = attn + jnp.dot(ctx, wo[lo:lo + dh, :],
                                  preferred_element_type=jnp.float32)
        attn = attn + bo

        # dropout == identity at inference
        h1 = _layer_norm(x + attn, g1, be1)
        ff = jnp.maximum(
            jnp.dot(h1, w1, preferred_element_type=jnp.float32) + b1, 0.0)
        ff = jnp.dot(ff, w2, preferred_element_type=jnp.float32) + b2
        # Output is dead in the reference graph (empty dec_blocks), so the
        # sub-128-lane (S, D) store cost here is irrelevant.
        o_ref[b] = _layer_norm(h1 + ff, g2, be2)


def decoder_project_kernel(x_ref, pe_ref, w_ref, b_ref, o_ref, *, embed_scale):
    """Decoder (embedding*sqrt(d) + pos-enc) fused with the tied output linear.

    Output last dim is padded to a multiple of 128 -> lane-dense, unmasked stores.
    """
    B, S, D = x_ref.shape
    pe = pe_ref[...]                                      # (S, D)
    w = w_ref[...]                                        # (D, Vpad)
    bias = b_ref[...]                                     # (1, Vpad)
    for b in range(B):                                    # static unroll
        x = x_ref[b] * embed_scale + pe                   # (S, D)
        o_ref[b] = jnp.dot(x, w, preferred_element_type=jnp.float32) + bias


# ------------------------------- wrappers ----------------------------------- #

def run_encoder_layer(x_emb, mask, pe, layer, num_heads, d_model):
    B, S, D = x_emb.shape
    kernel = functools.partial(encoder_layer_kernel, num_heads=num_heads,
                               embed_scale=float(d_model) ** 0.5)
    # No grid: whole problem is a few KB; everything lives in VMEM for one
    # invocation (default whole-array blocks).
    return pl.pallas_call(
        kernel,
        out_shape=jax.ShapeDtypeStruct((B, S, D), jnp.float32),
    )(x_emb, mask, pe,
      layer["wqkv"], layer["bqkv"], layer["wo"],
      layer["w1"], layer["b1"], layer["w2"], layer["vecs"])


def run_decoder_projection(x_emb, pe, w_out, b_out, d_model, vocab_size):
    B, S, D = x_emb.shape
    v_pad = w_out.shape[1]
    kernel = functools.partial(decoder_project_kernel,
                               embed_scale=float(d_model) ** 0.5)
    out = pl.pallas_call(
        kernel,
        out_shape=jax.ShapeDtypeStruct((B, S, v_pad), jnp.float32),
    )(x_emb, pe, w_out, b_out)
    return out[..., :vocab_size]                          # drop lane padding


# ----------------------------- params / glue -------------------------------- #

def positional_encoding(max_len, d_model):
    pos = jnp.arange(max_len, dtype=jnp.float32)[:, None]
    i = jnp.arange(0, d_model, 2, dtype=jnp.float32)
    div = jnp.exp(-jnp.log(10000.0) * i / d_model)
    pe = jnp.zeros((max_len, d_model), jnp.float32)
    pe = pe.at[:, 0::2].set(jnp.sin(pos * div))
    pe = pe.at[:, 1::2].set(jnp.cos(pos * div))
    return pe


def _round_up(x, m):
    return ((x + m - 1) // m) * m


def init_params(key, vocab_size, d_model, num_heads, num_layers, dim_ff, max_len):
    keys = jax.random.split(key, 2 + num_layers)
    emb = jax.random.normal(keys[0], (vocab_size, d_model), jnp.float32)  # ~ N(0,1)
    lin_b = 0.01 * jax.random.normal(keys[1], (vocab_size,), jnp.float32)

    # Tied output projection (linear.weight = embedding.weight): precompute
    # emb.T once, padded to a 128-lane-dense width; pad columns are zero.
    v_pad = _round_up(vocab_size, 128)
    w_out = jnp.zeros((d_model, v_pad), jnp.float32).at[:, :vocab_size].set(emb.T)
    b_out = jnp.zeros((1, v_pad), jnp.float32).at[0, :vocab_size].set(lin_b)

    s = 1.0 / (d_model ** 0.5)
    layers = []
    for l in range(num_layers):
        lk = jax.random.split(keys[2 + l], 6)
        wq = s * jax.random.normal(lk[0], (d_model, d_model), jnp.float32)
        wk = s * jax.random.normal(lk[1], (d_model, d_model), jnp.float32)
        wv = s * jax.random.normal(lk[2], (d_model, d_model), jnp.float32)
        layers.append(dict(
            wqkv=jnp.concatenate([wq, wk, wv], axis=1),            # (D, 3D)
            bqkv=jnp.zeros((1, 3 * d_model), jnp.float32),
            wo=s * jax.random.normal(lk[3], (d_model, d_model), jnp.float32),
            w1=s * jax.random.normal(lk[4], (d_model, dim_ff), jnp.float32),
            b1=jnp.zeros((1, dim_ff), jnp.float32),
            w2=(1.0 / dim_ff ** 0.5)
               * jax.random.normal(lk[5], (dim_ff, d_model), jnp.float32),
            # packed per-layer vectors: [bo, ln1_g, ln1_b, b2, ln2_g, ln2_b]
            vecs=jnp.stack([
                jnp.zeros((d_model,), jnp.float32),   # bo
                jnp.ones((d_model,), jnp.float32),    # layer_norm_1 gamma
                jnp.zeros((d_model,), jnp.float32),   # layer_norm_1 beta
                jnp.zeros((d_model,), jnp.float32),   # FFN second bias
                jnp.ones((d_model,), jnp.float32),    # layer_norm_2 gamma
                jnp.zeros((d_model,), jnp.float32),   # layer_norm_2 beta
            ], axis=0),
        ))
    return dict(embedding=emb, w_out=w_out, b_out=b_out, lin_b=lin_b,
                enc_layers=layers, pe=positional_encoding(max_len, d_model),
                d_model=d_model, num_heads=num_heads, vocab_size=vocab_size)


def transformer_forward(params, x_enc, enc_attn_mask, x_dec, dec_attn_mask):
    d_model = params["d_model"]
    emb = params["embedding"]
    pe = params["pe"]

    # --- Encoder --- (embedding gather stays in XLA; scale + pos-enc fused in-kernel)
    S_enc = x_enc.shape[1]
    xe = jnp.take(emb, x_enc, axis=0)                      # (B, S, D)
    # Reference TransformerEncoder.forward never reassigns x, so only the LAST
    # block's output is enc_out; earlier blocks are dead compute and skipped.
    enc_out = run_encoder_layer(xe, enc_attn_mask, pe[:S_enc],
                                params["enc_layers"][-1],
                                params["num_heads"], d_model)
    # enc_out is never consumed (reference dec_blocks is an empty Sequential);
    # do NOT sync on it — leave it asynchronously scheduled.
    del enc_out

    # --- Decoder (embedding*sqrt(d)+pos-enc) + tied output projection, fused ---
    S_dec = x_dec.shape[1]
    xd = jnp.take(emb, x_dec, axis=0)                      # (B, S, D)
    logits = run_decoder_projection(xd, pe[:S_dec], params["w_out"],
                                    params["b_out"], d_model,
                                    params["vocab_size"])
    return logits


# ----------------------- pure-JAX references (sanity) ----------------------- #

def _encoder_layer_ref(x_emb, mask, pe, layer, num_heads, d_model):
    B, S, D = x_emb.shape
    dh = D // num_heads
    x = x_emb * (float(d_model) ** 0.5) + pe[None]
    vecs = layer["vecs"]
    bo, g1, be1, b2, g2, be2 = (vecs[i] for i in range(6))
    qkv = x @ layer["wqkv"] + layer["bqkv"][0]             # (B, S, 3D)
    q, k, v = qkv[..., :D], qkv[..., D:2 * D], qkv[..., 2 * D:]

    def split(t):                                          # (B,S,D) -> (B,H,S,dh)
        return t.reshape(B, S, num_heads, dh).transpose(0, 2, 1, 3)

    qh, kh, vh = split(q), split(k), split(v)
    s = jnp.einsum('bhqd,bhkd->bhqk', qh, kh) / (dh ** 0.5)
    s = jnp.where(mask[:, None, :, :] == 0.0, -1e9, s)
    p = jax.nn.softmax(s, axis=-1)
    ctx = jnp.einsum('bhqk,bhkd->bhqd', p, vh)
    ctx = ctx.transpose(0, 2, 1, 3).reshape(B, S, D)
    attn = ctx @ layer["wo"] + bo
    h1 = _layer_norm(x + attn, g1, be1)
    ff = jnp.maximum(h1 @ layer["w1"] + layer["b1"][0], 0.0) @ layer["w2"] + b2
    return _layer_norm(h1 + ff, g2, be2)


def _decoder_logits_ref(x_dec, emb, pe, lin_b, d_model):
    x = jnp.take(emb, x_dec, axis=0) * (float(d_model) ** 0.5) + pe[None]
    return x @ emb.T + lin_b


# --------------------------------- main -------------------------------------- #

if __name__ == "__main__":
    vocab_size, d_model, num_heads = 64, 32, 4
    num_layers, dim_ff, dropout, max_len = 2, 64, 0.1, 16
    B, S_enc, S_dec = 2, 8, 8

    key = jax.random.PRNGKey(0)
    kp, ke, kd = jax.random.split(key, 3)
    params = init_params(kp, vocab_size, d_model, num_heads, num_layers,
                         dim_ff, max_len)

    x_enc = jax.random.randint(ke, (B, S_enc), 0, vocab_size, dtype=jnp.int32)
    x_dec = jax.random.randint(kd, (B, S_dec), 0, vocab_size, dtype=jnp.int32)
    # key-padding style masks: 1.0 = attend, 0.0 = masked
    enc_attn_mask = jnp.ones((B, 1, S_enc), jnp.float32).at[1, 0, S_enc - 2:].set(0.0)
    dec_attn_mask = jnp.ones((B, 1, S_dec), jnp.float32)   # unused (empty dec_blocks)

    logits = transformer_forward(params, x_enc, enc_attn_mask, x_dec, dec_attn_mask)
    jax.block_until_ready(logits)
    assert logits.shape == (B, S_dec, vocab_size)
    assert logits.dtype == jnp.float32

    # --- sanity checks vs pure-JAX references (loose tolerances: MXU f32 pass
    #     decomposition + EUP approx reciprocal in softmax) ---
    ref_logits = _decoder_logits_ref(x_dec, params["embedding"],
                                     params["pe"][:S_dec], params["lin_b"], d_model)
    assert jnp.allclose(logits, ref_logits, rtol=5e-2, atol=5e-1), "decoder/logits mismatch"

    xe = jnp.take(params["embedding"], x_enc, axis=0)
    enc_ker = run_encoder_layer(xe, enc_attn_mask, params["pe"][:S_enc],
                                params["enc_layers"][-1], num_heads, d_model)
    enc_ref = _encoder_layer_ref(xe, enc_attn_mask, params["pe"][:S_enc],
                                 params["enc_layers"][-1], num_heads, d_model)
    assert jnp.allclose(enc_ker, enc_ref, rtol=1e-1, atol=1e-1), "encoder layer mismatch"

    print("KERNEL_OK")
</pallas_src>

<mosaic_0001>
module attributes {stable_mosaic.version = 11 : i64} {
  func.func @encoder_layer_kernel(%arg0: memref<2x8x32xf32, #tpu.memory_space<vmem>>, %arg1: memref<2x1x8xf32, #tpu.memory_space<vmem>>, %arg2: memref<8x32xf32, #tpu.memory_space<vmem>>, %arg3: memref<32x96xf32, #tpu.memory_space<vmem>>, %arg4: memref<1x96xf32, #tpu.memory_space<vmem>>, %arg5: memref<32x32xf32, #tpu.memory_space<vmem>>, %arg6: memref<32x64xf32, #tpu.memory_space<vmem>>, %arg7: memref<1x64xf32, #tpu.memory_space<vmem>>, %arg8: memref<64x32xf32, #tpu.memory_space<vmem>>, %arg9: memref<6x32xf32, #tpu.memory_space<vmem>>, %arg10: memref<2x8x32xf32, #tpu.memory_space<vmem>>) attributes {dimension_semantics = [], scalar_prefetch = 0 : i64, scratch_operands = 0 : i64, tpu.core_type = #tpu.core_type<tc>} {
    %c0 = arith.constant 0 : index
    %c0_0 = arith.constant 0 : index
    %0 = vector.load %arg9[%c0, %c0_0] : memref<6x32xf32, #tpu.memory_space<vmem>>, vector<6x32xf32>
    %1 = vector.extract_strided_slice %0 {offsets = [0, 0], sizes = [1, 32], strides = [1, 1]} : vector<6x32xf32> to vector<1x32xf32>
    %2 = vector.extract_strided_slice %0 {offsets = [1, 0], sizes = [1, 32], strides = [1, 1]} : vector<6x32xf32> to vector<1x32xf32>
    %3 = vector.extract_strided_slice %0 {offsets = [2, 0], sizes = [1, 32], strides = [1, 1]} : vector<6x32xf32> to vector<1x32xf32>
    %4 = vector.extract_strided_slice %0 {offsets = [3, 0], sizes = [1, 32], strides = [1, 1]} : vector<6x32xf32> to vector<1x32xf32>
    %5 = vector.extract_strided_slice %0 {offsets = [4, 0], sizes = [1, 32], strides = [1, 1]} : vector<6x32xf32> to vector<1x32xf32>
    %6 = vector.extract_strided_slice %0 {offsets = [5, 0], sizes = [1, 32], strides = [1, 1]} : vector<6x32xf32> to vector<1x32xf32>
    %c0_1 = arith.constant 0 : index
    %c0_2 = arith.constant 0 : index
    %7 = vector.load %arg3[%c0_1, %c0_2] : memref<32x96xf32, #tpu.memory_space<vmem>>, vector<32x96xf32>
    %c0_3 = arith.constant 0 : index
    %c0_4 = arith.constant 0 : index
    %8 = vector.load %arg4[%c0_3, %c0_4] : memref<1x96xf32, #tpu.memory_space<vmem>>, vector<1x96xf32>
    %c0_5 = arith.constant 0 : index
    %c0_6 = arith.constant 0 : index
    %9 = vector.load %arg5[%c0_5, %c0_6] : memref<32x32xf32, #tpu.memory_space<vmem>>, vector<32x32xf32>
    %c0_7 = arith.constant 0 : index
    %c0_8 = arith.constant 0 : index
    %10 = vector.load %arg6[%c0_7, %c0_8] : memref<32x64xf32, #tpu.memory_space<vmem>>, vector<32x64xf32>
    %c0_9 = arith.constant 0 : index
    %c0_10 = arith.constant 0 : index
    %11 = vector.load %arg7[%c0_9, %c0_10] : memref<1x64xf32, #tpu.memory_space<vmem>>, vector<1x64xf32>
    %c0_11 = arith.constant 0 : index
    %c0_12 = arith.constant 0 : index
    %12 = vector.load %arg8[%c0_11, %c0_12] : memref<64x32xf32, #tpu.memory_space<vmem>>, vector<64x32xf32>
    %c0_13 = arith.constant 0 : index
    %c0_14 = arith.constant 0 : index
    %13 = vector.load %arg2[%c0_13, %c0_14] : memref<8x32xf32, #tpu.memory_space<vmem>>, vector<8x32xf32>
    %c0_15 = arith.constant 0 : index
    %c0_16 = arith.constant 0 : index
    %c0_17 = arith.constant 0 : index
    %14 = vector.load %arg0[%c0_15, %c0_16, %c0_17] : memref<2x8x32xf32, #tpu.memory_space<vmem>>, vector<1x8x32xf32>
    %15 = vector.shape_cast %14 : vector<1x8x32xf32> to vector<8x32xf32>
    %cst = arith.constant 5.65685415 : f32
    %16 = vector.broadcast %cst : f32 to vector<8x32xf32>
    %17 = arith.mulf %15, %16 : vector<8x32xf32>
    %18 = arith.addf %17, %13 : vector<8x32xf32>
    %c0_18 = arith.constant 0 : index
    %c0_19 = arith.constant 0 : index
    %c0_20 = arith.constant 0 : index
    %19 = vector.load %arg1[%c0_18, %c0_19, %c0_20] : memref<2x1x8xf32, #tpu.memory_space<vmem>>, vector<1x1x8xf32>
    %20 = vector.shape_cast %19 : vector<1x1x8xf32> to vector<1x8xf32>
    %cst_21 = arith.constant 0.000000e+00 : f32
    %21 = vector.broadcast %cst_21 : f32 to vector<1x8xf32>
    %22 = arith.cmpf oeq, %20, %21 : vector<1x8xf32>
    %cst_22 = arith.constant dense<0.000000e+00> : vector<8x96xf32>
    %23 = tpu.matmul %18, %7, %cst_22 {dimension_numbers = #tpu.dot_dimension_numbers<[1], [0], [0], [1], [0, 0, 1, 1], [], []>} : vector<8x32xf32>, vector<32x96xf32>, vector<8x96xf32> -> vector<8x96xf32>
    %24 = vector.broadcast %8 : vector<1x96xf32> to vector<8x96xf32>
    %25 = arith.addf %23, %24 : vector<8x96xf32>
    %cst_23 = arith.constant 0.000000e+00 : f32
    %26 = vector.broadcast %cst_23 : f32 to vector<8x32xf32>
    %27 = vector.extract_strided_slice %25 {offsets = [0, 0], sizes = [8, 8], strides = [1, 1]} : vector<8x96xf32> to vector<8x8xf32>
    %28 = vector.extract_strided_slice %25 {offsets = [0, 32], sizes = [8, 8], strides = [1, 1]} : vector<8x96xf32> to vector<8x8xf32>
    %29 = vector.extract_strided_slice %25 {offsets = [0, 64], sizes = [8, 8], strides = [1, 1]} : vector<8x96xf32> to vector<8x8xf32>
    %30 = tpu.transpose %28, [1, 0] : vector<8x8xf32> -> vector<8x8xf32>
    %cst_24 = arith.constant dense<0.000000e+00> : vector<8x8xf32>
    %31 = tpu.matmul %27, %30, %cst_24 {dimension_numbers = #tpu.dot_dimension_numbers<[1], [0], [0], [1], [0, 0, 1, 1], [], []>} : vector<8x8xf32>, vector<8x8xf32>, vector<8x8xf32> -> vector<8x8xf32>
    %cst_25 = arith.constant 0.353553385 : f32
    %32 = vector.broadcast %cst_25 : f32 to vector<8x8xf32>
    %33 = arith.mulf %31, %32 : vector<8x8xf32>
    %cst_26 = arith.constant -1.000000e+09 : f32
    %34 = vector.shape_cast %22 : vector<1x8xi1> to vector<1x8xi1>
    %35 = vector.broadcast %34 : vector<1x8xi1> to vector<8x8xi1>
    %36 = vector.broadcast %cst_26 : f32 to vector<8x8xf32>
    %37 = arith.select %35, %36, %33 : vector<8x8xi1>, vector<8x8xf32>
    %cst_27 = arith.constant dense<0xFF800000> : vector<8xf32>
    %38 = vector.multi_reduction <maximumf>, %37, %cst_27 [1] : vector<8x8xf32> to vector<8xf32>
    %39 = vector.shape_cast %38 : vector<8xf32> to vector<8x1xf32>
    %40 = vector.broadcast %39 : vector<8x1xf32> to vector<8x8xf32>
    %41 = arith.subf %37, %40 : vector<8x8xf32>
    %42 = math.exp %41 : vector<8x8xf32>
    %cst_28 = arith.constant dense<0.000000e+00> : vector<8xf32>
    %43 = vector.multi_reduction <add>, %42, %cst_28 [1] : vector<8x8xf32> to vector<8xf32>
    %44 = vector.shape_cast %43 : vector<8xf32> to vector<8x1xf32>
    %45 = tpu.reciprocal %44 {approx = true} : vector<8x1xf32> -> vector<8x1xf32>
    %46 = vector.broadcast %45 : vector<8x1xf32> to vector<8x8xf32>
    %47 = arith.mulf %42, %46 : vector<8x8xf32>
    %cst_29 = arith.constant dense<0.000000e+00> : vector<8x8xf32>
    %48 = tpu.matmul %47, %29, %cst_29 {dimension_numbers = #tpu.dot_dimension_numbers<[1], [0], [0], [1], [0, 0, 1, 1], [], []>} : vector<8x8xf32>, vector<8x8xf32>, vector<8x8xf32> -> vector<8x8xf32>
    %49 = vector.extract_strided_slice %9 {offsets = [0, 0], sizes = [8, 32], strides = [1, 1]} : vector<32x32xf32> to vector<8x32xf32>
    %cst_30 = arith.constant dense<0.000000e+00> : vector<8x32xf32>
    %50 = tpu.matmul %48, %49, %cst_30 {dimension_numbers = #tpu.dot_dimension_numbers<[1], [0], [0], [1], [0, 0, 1, 1], [], []>} : vector<8x8xf32>, vector<8x32xf32>, vector<8x32xf32> -> vector<8x32xf32>
    %51 = arith.addf %26, %50 : vector<8x32xf32>
    %52 = vector.extract_strided_slice %25 {offsets = [0, 8], sizes = [8, 8], strides = [1, 1]} : vector<8x96xf32> to vector<8x8xf32>
    %53 = vector.extract_strided_slice %25 {offsets = [0, 40], sizes = [8, 8], strides = [1, 1]} : vector<8x96xf32> to vector<8x8xf32>
    %54 = vector.extract_strided_slice %25 {offsets = [0, 72], sizes = [8, 8], strides = [1, 1]} : vector<8x96xf32> to vector<8x8xf32>
    %55 = tpu.transpose %53, [1, 0] : vector<8x8xf32> -> vector<8x8xf32>
    %cst_31 = arith.constant dense<0.000000e+00> : vector<8x8xf32>
    %56 = tpu.matmul %52, %55, %cst_31 {dimension_numbers = #tpu.dot_dimension_numbers<[1], [0], [0], [1], [0, 0, 1, 1], [], []>} : vector<8x8xf32>, vector<8x8xf32>, vector<8x8xf32> -> vector<8x8xf32>
    %cst_32 = arith.constant 0.353553385 : f32
    %57 = vector.broadcast %cst_32 : f32 to vector<8x8xf32>
    %58 = arith.mulf %56, %57 : vector<8x8xf32>
    %cst_33 = arith.constant -1.000000e+09 : f32
    %59 = vector.shape_cast %22 : vector<1x8xi1> to vector<1x8xi1>
    %60 = vector.broadcast %59 : vector<1x8xi1> to vector<8x8xi1>
    %61 = vector.broadcast %cst_33 : f32 to vector<8x8xf32>
    %62 = arith.select %60, %61, %58 : vector<8x8xi1>, vector<8x8xf32>
    %cst_34 = arith.constant dense<0xFF800000> : vector<8xf32>
    %63 = vector.multi_reduction <maximumf>, %62, %cst_34 [1] : vector<8x8xf32> to vector<8xf32>
    %64 = vector.shape_cast %63 : vector<8xf32> to vector<8x1xf32>
    %65 = vector.broadcast %64 : vector<8x1xf32> to vector<8x8xf32>
    %66 = arith.subf %62, %65 : vector<8x8xf32>
    %67 = math.exp %66 : vector<8x8xf32>
    %cst_35 = arith.constant dense<0.000000e+00> : vector<8xf32>
    %68 = vector.multi_reduction <add>, %67, %cst_35 [1] : vector<8x8xf32> to vector<8xf32>
    %69 = vector.shape_cast %68 : vector<8xf32> to vector<8x1xf32>
    %70 = tpu.reciprocal %69 {approx = true} : vector<8x1xf32> -> vector<8x1xf32>
    %71 = vector.broadcast %70 : vector<8x1xf32> to vector<8x8xf32>
    %72 = arith.mulf %67, %71 : vector<8x8xf32>
    %cst_36 = arith.constant dense<0.000000e+00> : vector<8x8xf32>
    %73 = tpu.matmul %72, %54, %cst_36 {dimension_numbers = #tpu.dot_dimension_numbers<[1], [0], [0], [1], [0, 0, 1, 1], [], []>} : vector<8x8xf32>, vector<8x8xf32>, vector<8x8xf32> -> vector<8x8xf32>
    %74 = vector.extract_strided_slice %9 {offsets = [8, 0], sizes = [8, 32], strides = [1, 1]} : vector<32x32xf32> to vector<8x32xf32>
    %cst_37 = arith.constant dense<0.000000e+00> : vector<8x32xf32>
    %75 = tpu.matmul %73, %74, %cst_37 {dimension_numbers = #tpu.dot_dimension_numbers<[1], [0], [0], [1], [0, 0, 1, 1], [], []>} : vector<8x8xf32>, vector<8x32xf32>, vector<8x32xf32> -> vector<8x32xf32>
    %76 = arith.addf %51, %75 : vector<8x32xf32>
    %77 = vector.extract_strided_slice %25 {offsets = [0, 16], sizes = [8, 8], strides = [1, 1]} : vector<8x96xf32> to vector<8x8xf32>
    %78 = vector.extract_strided_slice %25 {offsets = [0, 48], sizes = [8, 8], strides = [1, 1]} : vector<8x96xf32> to vector<8x8xf32>
    %79 = vector.extract_strided_slice %25 {offsets = [0, 80], sizes = [8, 8], strides = [1, 1]} : vector<8x96xf32> to vector<8x8xf32>
    %80 = tpu.transpose %78, [1, 0] : vector<8x8xf32> -> vector<8x8xf32>
    %cst_38 = arith.constant dense<0.000000e+00> : vector<8x8xf32>
    %81 = tpu.matmul %77, %80, %cst_38 {dimension_numbers = #tpu.dot_dimension_numbers<[1], [0], [0], [1], [0, 0, 1, 1], [], []>} : vector<8x8xf32>, vector<8x8xf32>, vector<8x8xf32> -> vector<8x8xf32>
    %cst_39 = arith.constant 0.353553385 : f32
    %82 = vector.broadcast %cst_39 : f32 to vector<8x8xf32>
    %83 = arith.mulf %81, %82 : vector<8x8xf32>
    %cst_40 = arith.constant -1.000000e+09 : f32
    %84 = vector.shape_cast %22 : vector<1x8xi1> to vector<1x8xi1>
    %85 = vector.broadcast %84 : vector<1x8xi1> to vector<8x8xi1>
    %86 = vector.broadcast %cst_40 : f32 to vector<8x8xf32>
    %87 = arith.select %85, %86, %83 : vector<8x8xi1>, vector<8x8xf32>
    %cst_41 = arith.constant dense<0xFF800000> : vector<8xf32>
    %88 = vector.multi_reduction <maximumf>, %87, %cst_41 [1] : vector<8x8xf32> to vector<8xf32>
    %89 = vector.shape_cast %88 : vector<8xf32> to vector<8x1xf32>
    %90 = vector.broadcast %89 : vector<8x1xf32> to vector<8x8xf32>
    %91 = arith.subf %87, %90 : vector<8x8xf32>
    %92 = math.exp %91 : vector<8x8xf32>
    %cst_42 = arith.constant dense<0.000000e+00> : vector<8xf32>
    %93 = vector.multi_reduction <add>, %92, %cst_42 [1] : vector<8x8xf32> to vector<8xf32>
    %94 = vector.shape_cast %93 : vector<8xf32> to vector<8x1xf32>
    %95 = tpu.reciprocal %94 {approx = true} : vector<8x1xf32> -> vector<8x1xf32>
    %96 = vector.broadcast %95 : vector<8x1xf32> to vector<8x8xf32>
    %97 = arith.mulf %92, %96 : vector<8x8xf32>
    %cst_43 = arith.constant dense<0.000000e+00> : vector<8x8xf32>
    %98 = tpu.matmul %97, %79, %cst_43 {dimension_numbers = #tpu.dot_dimension_numbers<[1], [0], [0], [1], [0, 0, 1, 1], [], []>} : vector<8x8xf32>, vector<8x8xf32>, vector<8x8xf32> -> vector<8x8xf32>
    %99 = vector.extract_strided_slice %9 {offsets = [16, 0], sizes = [8, 32], strides = [1, 1]} : vector<32x32xf32> to vector<8x32xf32>
    %cst_44 = arith.constant dense<0.000000e+00> : vector<8x32xf32>
    %100 = tpu.matmul %98, %99, %cst_44 {dimension_numbers = #tpu.dot_dimension_numbers<[1], [0], [0], [1], [0, 0, 1, 1], [], []>} : vector<8x8xf32>, vector<8x32xf32>, vector<8x32xf32> -> vector<8x32xf32>
    %101 = arith.addf %76, %100 : vector<8x32xf32>
    %102 = vector.extract_strided_slice %25 {offsets = [0, 24], sizes = [8, 8], strides = [1, 1]} : vector<8x96xf32> to vector<8x8xf32>
    %103 = vector.extract_strided_slice %25 {offsets = [0, 56], sizes = [8, 8], strides = [1, 1]} : vector<8x96xf32> to vector<8x8xf32>
    %104 = vector.extract_strided_slice %25 {offsets = [0, 88], sizes = [8, 8], strides = [1, 1]} : vector<8x96xf32> to vector<8x8xf32>
    %105 = tpu.transpose %103, [1, 0] : vector<8x8xf32> -> vector<8x8xf32>
    %cst_45 = arith.constant dense<0.000000e+00> : vector<8x8xf32>
    %106 = tpu.matmul %102, %105, %cst_45 {dimension_numbers = #tpu.dot_dimension_numbers<[1], [0], [0], [1], [0, 0, 1, 1], [], []>} : vector<8x8xf32>, vector<8x8xf32>, vector<8x8xf32> -> vector<8x8xf32>
    %cst_46 = arith.constant 0.353553385 : f32
    %107 = vector.broadcast %cst_46 : f32 to vector<8x8xf32>
    %108 = arith.mulf %106, %107 : vector<8x8xf32>
    %cst_47 = arith.constant -1.000000e+09 : f32
    %109 = vector.shape_cast %22 : vector<1x8xi1> to vector<1x8xi1>
    %110 = vector.broadcast %109 : vector<1x8xi1> to vector<8x8xi1>
    %111 = vector.broadcast %cst_47 : f32 to vector<8x8xf32>
    %112 = arith.select %110, %111, %108 : vector<8x8xi1>, vector<8x8xf32>
    %cst_48 = arith.constant dense<0xFF800000> : vector<8xf32>
    %113 = vector.multi_reduction <maximumf>, %112, %cst_48 [1] : vector<8x8xf32> to vector<8xf32>
    %114 = vector.shape_cast %113 : vector<8xf32> to vector<8x1xf32>
    %115 = vector.broadcast %114 : vector<8x1xf32> to vector<8x8xf32>
    %116 = arith.subf %112, %115 : vector<8x8xf32>
    %117 = math.exp %116 : vector<8x8xf32>
    %cst_49 = arith.constant dense<0.000000e+00> : vector<8xf32>
    %118 = vector.multi_reduction <add>, %117, %cst_49 [1] : vector<8x8xf32> to vector<8xf32>
    %119 = vector.shape_cast %118 : vector<8xf32> to vector<8x1xf32>
    %120 = tpu.reciprocal %119 {approx = true} : vector<8x1xf32> -> vector<8x1xf32>
    %121 = vector.broadcast %120 : vector<8x1xf32> to vector<8x8xf32>
    %122 = arith.mulf %117, %121 : vector<8x8xf32>
    %cst_50 = arith.constant dense<0.000000e+00> : vector<8x8xf32>
    %123 = tpu.matmul %122, %104, %cst_50 {dimension_numbers = #tpu.dot_dimension_numbers<[1], [0], [0], [1], [0, 0, 1, 1], [], []>} : vector<8x8xf32>, vector<8x8xf32>, vector<8x8xf32> -> vector<8x8xf32>
    %124 = vector.extract_strided_slice %9 {offsets = [24, 0], sizes = [8, 32], strides = [1, 1]} : vector<32x32xf32> to vector<8x32xf32>
    %cst_51 = arith.constant dense<0.000000e+00> : vector<8x32xf32>
    %125 = tpu.matmul %123, %124, %cst_51 {dimension_numbers = #tpu.dot_dimension_numbers<[1], [0], [0], [1], [0, 0, 1, 1], [], []>} : vector<8x8xf32>, vector<8x32xf32>, vector<8x32xf32> -> vector<8x32xf32>
    %126 = arith.addf %101, %125 : vector<8x32xf32>
    %127 = vector.broadcast %1 : vector<1x32xf32> to vector<8x32xf32>
    %128 = arith.addf %126, %127 : vector<8x32xf32>
    %129 = arith.addf %18, %128 : vector<8x32xf32>
    %cst_52 = arith.constant dense<0.000000e+00> : vector<8xf32>
    %130 = vector.multi_reduction <add>, %129, %cst_52 [1] : vector<8x32xf32> to vector<8xf32>
    %131 = vector.shape_cast %130 : vector<8xf32> to vector<8x1xf32>
    %cst_53 = arith.constant 3.200000e+01 : f32
    %132 = vector.broadcast %cst_53 : f32 to vector<8x1xf32>
    %133 = arith.divf %131, %132 : vector<8x1xf32>
    %134 = vector.broadcast %133 : vector<8x1xf32> to vector<8x32xf32>
    %135 = arith.subf %129, %134 : vector<8x32xf32>
    %136 = arith.mulf %135, %135 : vector<8x32xf32>
    %cst_54 = arith.constant dense<0.000000e+00> : vector<8xf32>
    %137 = vector.multi_reduction <add>, %136, %cst_54 [1] : vector<8x32xf32> to vector<8xf32>
    %138 = vector.shape_cast %137 : vector<8xf32> to vector<8x1xf32>
    %cst_55 = arith.constant 3.200000e+01 : f32
    %139 = vector.broadcast %cst_55 : f32 to vector<8x1xf32>
    %140 = arith.divf %138, %139 : vector<8x1xf32>
    %141 = vector.broadcast %133 : vector<8x1xf32> to vector<8x32xf32>
    %142 = arith.subf %129, %141 : vector<8x32xf32>
    %cst_56 = arith.constant 9.99999974E-6 : f32
    %143 = vector.broadcast %cst_56 : f32 to vector<8x1xf32>
    %144 = arith.addf %140, %143 : vector<8x1xf32>
    %145 = math.rsqrt %144 : vector<8x1xf32>
    %146 = vector.broadcast %145 : vector<8x1xf32> to vector<8x32xf32>
    %147 = arith.mulf %142, %146 : vector<8x32xf32>
    %148 = vector.broadcast %2 : vector<1x32xf32> to vector<8x32xf32>
    %149 = arith.mulf %147, %148 : vector<8x32xf32>
    %150 = vector.broadcast %3 : vector<1x32xf32> to vector<8x32xf32>
    %151 = arith.addf %149, %150 : vector<8x32xf32>
    %cst_57 = arith.constant dense<0.000000e+00> : vector<8x64xf32>
    %152 = tpu.matmul %151, %10, %cst_57 {dimension_numbers = #tpu.dot_dimension_numbers<[1], [0], [0], [1], [0, 0, 1, 1], [], []>} : vector<8x32xf32>, vector<32x64xf32>, vector<8x64xf32> -> vector<8x64xf32>
    %153 = vector.broadcast %11 : vector<1x64xf32> to vector<8x64xf32>
    %154 = arith.addf %152, %153 : vector<8x64xf32>
    %cst_58 = arith.constant 0.000000e+00 : f32
    %155 = vector.broadcast %cst_58 : f32 to vector<8x64xf32>
    %156 = arith.maximumf %154, %155 : vector<8x64xf32>
    %cst_59 = arith.constant dense<0.000000e+00> : vector<8x32xf32>
    %157 = tpu.matmul %156, %12, %cst_59 {dimension_numbers = #tpu.dot_dimension_numbers<[1], [0], [0], [1], [0, 0, 1, 1], [], []>} : vector<8x64xf32>, vector<64x32xf32>, vector<8x32xf32> -> vector<8x32xf32>
    %158 = vector.broadcast %4 : vector<1x32xf32> to vector<8x32xf32>
    %159 = arith.addf %157, %158 : vector<8x32xf32>
    %160 = arith.addf %151, %159 : vector<8x32xf32>
    %cst_60 = arith.constant dense<0.000000e+00> : vector<8xf32>
    %161 = vector.multi_reduction <add>, %160, %cst_60 [1] : vector<8x32xf32> to vector<8xf32>
    %162 = vector.shape_cast %161 : vector<8xf32> to vector<8x1xf32>
    %cst_61 = arith.constant 3.200000e+01 : f32
    %163 = vector.broadcast %cst_61 : f32 to vector<8x1xf32>
    %164 = arith.divf %162, %163 : vector<8x1xf32>
    %165 = vector.broadcast %164 : vector<8x1xf32> to vector<8x32xf32>
    %166 = arith.subf %160, %165 : vector<8x32xf32>
    %167 = arith.mulf %166, %166 : vector<8x32xf32>
    %cst_62 = arith.constant dense<0.000000e+00> : vector<8xf32>
    %168 = vector.multi_reduction <add>, %167, %cst_62 [1] : vector<8x32xf32> to vector<8xf32>
    %169 = vector.shape_cast %168 : vector<8xf32> to vector<8x1xf32>
    %cst_63 = arith.constant 3.200000e+01 : f32
    %170 = vector.broadcast %cst_63 : f32 to vector<8x1xf32>
    %171 = arith.divf %169, %170 : vector<8x1xf32>
    %172 = vector.broadcast %164 : vector<8x1xf32> to vector<8x32xf32>
    %173 = arith.subf %160, %172 : vector<8x32xf32>
    %cst_64 = arith.constant 9.99999974E-6 : f32
    %174 = vector.broadcast %cst_64 : f32 to vector<8x1xf32>
    %175 = arith.addf %171, %174 : vector<8x1xf32>
    %176 = math.rsqrt %175 : vector<8x1xf32>
    %177 = vector.broadcast %176 : vector<8x1xf32> to vector<8x32xf32>
    %178 = arith.mulf %173, %177 : vector<8x32xf32>
    %179 = vector.broadcast %5 : vector<1x32xf32> to vector<8x32xf32>
    %180 = arith.mulf %178, %179 : vector<8x32xf32>
    %181 = vector.broadcast %6 : vector<1x32xf32> to vector<8x32xf32>
    %182 = arith.addf %180, %181 : vector<8x32xf32>
    %c0_65 = arith.constant 0 : index
    %c0_66 = arith.constant 0 : index
    %c0_67 = arith.constant 0 : index
    %183 = vector.load %arg10[%c0_65, %c0_66, %c0_67] : memref<2x8x32xf32, #tpu.memory_space<vmem>>, vector<1x8x32xf32>
    %184 = vector.shape_cast %183 : vector<1x8x32xf32> to vector<8x32xf32>
    %185 = vector.shape_cast %182 : vector<8x32xf32> to vector<1x8x32xf32>
    tpu.vector_store %arg10[%c0_65, %c0_66, %c0_67], %185 {strides = array<i32>} : memref<2x8x32xf32, #tpu.memory_space<vmem>>, vector<1x8x32xf32>,
    %c1 = arith.constant 1 : index
    %c0_68 = arith.constant 0 : index
    %c0_69 = arith.constant 0 : index
    %186 = vector.load %arg0[%c1, %c0_68, %c0_69] : memref<2x8x32xf32, #tpu.memory_space<vmem>>, vector<1x8x32xf32>
    %187 = vector.shape_cast %186 : vector<1x8x32xf32> to vector<8x32xf32>
    %cst_70 = arith.constant 5.65685415 : f32
    %188 = vector.broadcast %cst_70 : f32 to vector<8x32xf32>
    %189 = arith.mulf %187, %188 : vector<8x32xf32>
    %190 = arith.addf %189, %13 : vector<8x32xf32>
    %c1_71 = arith.constant 1 : index
    %c0_72 = arith.constant 0 : index
    %c0_73 = arith.constant 0 : index
    %191 = vector.load %arg1[%c1_71, %c0_72, %c0_73] : memref<2x1x8xf32, #tpu.memory_space<vmem>>, vector<1x1x8xf32>
    %192 = vector.shape_cast %191 : vector<1x1x8xf32> to vector<1x8xf32>
    %cst_74 = arith.constant 0.000000e+00 : f32
    %193 = vector.broadcast %cst_74 : f32 to vector<1x8xf32>
    %194 = arith.cmpf oeq, %192, %193 : vector<1x8xf32>
    %cst_75 = arith.constant dense<0.000000e+00> : vector<8x96xf32>
    %195 = tpu.matmul %190, %7, %cst_75 {dimension_numbers = #tpu.dot_dimension_numbers<[1], [0], [0], [1], [0, 0, 1, 1], [], []>} : vector<8x32xf32>, vector<32x96xf32>, vector<8x96xf32> -> vector<8x96xf32>
    %196 = vector.broadcast %8 : vector<1x96xf32> to vector<8x96xf32>
    %197 = arith.addf %195, %196 : vector<8x96xf32>
    %cst_76 = arith.constant 0.000000e+00 : f32
    %198 = vector.broadcast %cst_76 : f32 to vector<8x32xf32>
    %199 = vector.extract_strided_slice %197 {offsets = [0, 0], sizes = [8, 8], strides = [1, 1]} : vector<8x96xf32> to vector<8x8xf32>
    %200 = vector.extract_strided_slice %197 {offsets = [0, 32], sizes = [8, 8], strides = [1, 1]} : vector<8x96xf32> to vector<8x8xf32>
    %201 = vector.extract_strided_slice %197 {offsets = [0, 64], sizes = [8, 8], strides = [1, 1]} : vector<8x96xf32> to vector<8x8xf32>
    %202 = tpu.transpose %200, [1, 0] : vector<8x8xf32> -> vector<8x8xf32>
    %cst_77 = arith.constant dense<0.000000e+00> : vector<8x8xf32>
    %203 = tpu.matmul %199, %202, %cst_77 {dimension_numbers = #tpu.dot_dimension_numbers<[1], [0], [0], [1], [0, 0, 1, 1], [], []>} : vector<8x8xf32>, vector<8x8xf32>, vector<8x8xf32> -> vector<8x8xf32>
    %cst_78 = arith.constant 0.353553385 : f32
    %204 = vector.broadcast %cst_78 : f32 to vector<8x8xf32>
    %205 = arith.mulf %203, %204 : vector<8x8xf32>
    %cst_79 = arith.constant -1.000000e+09 : f32
    %206 = vector.shape_cast %194 : vector<1x8xi1> to vector<1x8xi1>
    %207 = vector.broadcast %206 : vector<1x8xi1> to vector<8x8xi1>
    %208 = vector.broadcast %cst_79 : f32 to vector<8x8xf32>
    %209 = arith.select %207, %208, %205 : vector<8x8xi1>, vector<8x8xf32>
    %cst_80 = arith.constant dense<0xFF800000> : vector<8xf32>
    %210 = vector.multi_reduction <maximumf>, %209, %cst_80 [1] : vector<8x8xf32> to vector<8xf32>
    %211 = vector.shape_cast %210 : vector<8xf32> to vector<8x1xf32>
    %212 = vector.broadcast %211 : vector<8x1xf32> to vector<8x8xf32>
    %213 = arith.subf %209, %212 : vector<8x8xf32>
    %214 = math.exp %213 : vector<8x8xf32>
    %cst_81 = arith.constant dense<0.000000e+00> : vector<8xf32>
    %215 = vector.multi_reduction <add>, %214, %cst_81 [1] : vector<8x8xf32> to vector<8xf32>
    %216 = vector.shape_cast %215 : vector<8xf32> to vector<8x1xf32>
    %217 = tpu.reciprocal %216 {approx = true} : vector<8x1xf32> -> vector<8x1xf32>
    %218 = vector.broadcast %217 : vector<8x1xf32> to vector<8x8xf32>
    %219 = arith.mulf %214, %218 : vector<8x8xf32>
    %cst_82 = arith.constant dense<0.000000e+00> : vector<8x8xf32>
    %220 = tpu.matmul %219, %201, %cst_82 {dimension_numbers = #tpu.dot_dimension_numbers<[1], [0], [0], [1], [0, 0, 1, 1], [], []>} : vector<8x8xf32>, vector<8x8xf32>, vector<8x8xf32> -> vector<8x8xf32>
    %221 = vector.extract_strided_slice %9 {offsets = [0, 0], sizes = [8, 32], strides = [1, 1]} : vector<32x32xf32> to vector<8x32xf32>
    %cst_83 = arith.constant dense<0.000000e+00> : vector<8x32xf32>
    %222 = tpu.matmul %220, %221, %cst_83 {dimension_numbers = #tpu.dot_dimension_numbers<[1], [0], [0], [1], [0, 0, 1, 1], [], []>} : vector<8x8xf32>, vector<8x32xf32>, vector<8x32xf32> -> vector<8x32xf32>
    %223 = arith.addf %198, %222 : vector<8x32xf32>
    %224 = vector.extract_strided_slice %197 {offsets = [0, 8], sizes = [8, 8], strides = [1, 1]} : vector<8x96xf32> to vector<8x8xf32>
    %225 = vector.extract_strided_slice %197 {offsets = [0, 40], sizes = [8, 8], strides = [1, 1]} : vector<8x96xf32> to vector<8x8xf32>
    %226 = vector.extract_strided_slice %197 {offsets = [0, 72], sizes = [8, 8], strides = [1, 1]} : vector<8x96xf32> to vector<8x8xf32>
    %227 = tpu.transpose %225, [1, 0] : vector<8x8xf32> -> vector<8x8xf32>
    %cst_84 = arith.constant dense<0.000000e+00> : vector<8x8xf32>
    %228 = tpu.matmul %224, %227, %cst_84 {dimension_numbers = #tpu.dot_dimension_numbers<[1], [0], [0], [1], [0, 0, 1, 1], [], []>} : vector<8x8xf32>, vector<8x8xf32>, vector<8x8xf32> -> vector<8x8xf32>
    %cst_85 = arith.constant 0.353553385 : f32
    %229 = vector.broadcast %cst_85 : f32 to vector<8x8xf32>
    %230 = arith.mulf %228, %229 : vector<8x8xf32>
    %cst_86 = arith.constant -1.000000e+09 : f32
    %231 = vector.shape_cast %194 : vector<1x8xi1> to vector<1x8xi1>
    %232 = vector.broadcast %231 : vector<1x8xi1> to vector<8x8xi1>
    %233 = vector.broadcast %cst_86 : f32 to vector<8x8xf32>
    %234 = arith.select %232, %233, %230 : vector<8x8xi1>, vector<8x8xf32>
    %cst_87 = arith.constant dense<0xFF800000> : vector<8xf32>
    %235 = vector.multi_reduction <maximumf>, %234, %cst_87 [1] : vector<8x8xf32> to vector<8xf32>
    %236 = vector.shape_cast %235 : vector<8xf32> to vector<8x1xf32>
    %237 = vector.broadcast %236 : vector<8x1xf32> to vector<8x8xf32>
    %238 = arith.subf %234, %237 : vector<8x8xf32>
    %239 = math.exp %238 : vector<8x8xf32>
    %cst_88 = arith.constant dense<0.000000e+00> : vector<8xf32>
    %240 = vector.multi_reduction <add>, %239, %cst_88 [1] : vector<8x8xf32> to vector<8xf32>
    %241 = vector.shape_cast %240 : vector<8xf32> to vector<8x1xf32>
    %242 = tpu.reciprocal %241 {approx = true} : vector<8x1xf32> -> vector<8x1xf32>
    %243 = vector.broadcast %242 : vector<8x1xf32> to vector<8x8xf32>
    %244 = arith.mulf %239, %243 : vector<8x8xf32>
    %cst_89 = arith.constant dense<0.000000e+00> : vector<8x8xf32>
    %245 = tpu.matmul %244, %226, %cst_89 {dimension_numbers = #tpu.dot_dimension_numbers<[1], [0], [0], [1], [0, 0, 1, 1], [], []>} : vector<8x8xf32>, vector<8x8xf32>, vector<8x8xf32> -> vector<8x8xf32>
    %246 = vector.extract_strided_slice %9 {offsets = [8, 0], sizes = [8, 32], strides = [1, 1]} : vector<32x32xf32> to vector<8x32xf32>
    %cst_90 = arith.constant dense<0.000000e+00> : vector<8x32xf32>
    %247 = tpu.matmul %245, %246, %cst_90 {dimension_numbers = #tpu.dot_dimension_numbers<[1], [0], [0], [1], [0, 0, 1, 1], [], []>} : vector<8x8xf32>, vector<8x32xf32>, vector<8x32xf32> -> vector<8x32xf32>
    %248 = arith.addf %223, %247 : vector<8x32xf32>
    %249 = vector.extract_strided_slice %197 {offsets = [0, 16], sizes = [8, 8], strides = [1, 1]} : vector<8x96xf32> to vector<8x8xf32>
    %250 = vector.extract_strided_slice %197 {offsets = [0, 48], sizes = [8, 8], strides = [1, 1]} : vector<8x96xf32> to vector<8x8xf32>
    %251 = vector.extract_strided_slice %197 {offsets = [0, 80], sizes = [8, 8], strides = [1, 1]} : vector<8x96xf32> to vector<8x8xf32>
    %252 = tpu.transpose %250, [1, 0] : vector<8x8xf32> -> vector<8x8xf32>
    %cst_91 = arith.constant dense<0.000000e+00> : vector<8x8xf32>
    %253 = tpu.matmul %249, %252, %cst_91 {dimension_numbers = #tpu.dot_dimension_numbers<[1], [0], [0], [1], [0, 0, 1, 1], [], []>} : vector<8x8xf32>, vector<8x8xf32>, vector<8x8xf32> -> vector<8x8xf32>
    %cst_92 = arith.constant 0.353553385 : f32
    %254 = vector.broadcast %cst_92 : f32 to vector<8x8xf32>
    %255 = arith.mulf %253, %254 : vector<8x8xf32>
    %cst_93 = arith.constant -1.000000e+09 : f32
    %256 = vector.shape_cast %194 : vector<1x8xi1> to vector<1x8xi1>
    %257 = vector.broadcast %256 : vector<1x8xi1> to vector<8x8xi1>
    %258 = vector.broadcast %cst_93 : f32 to vector<8x8xf32>
    %259 = arith.select %257, %258, %255 : vector<8x8xi1>, vector<8x8xf32>
    %cst_94 = arith.constant dense<0xFF800000> : vector<8xf32>
    %260 = vector.multi_reduction <maximumf>, %259, %cst_94 [1] : vector<8x8xf32> to vector<8xf32>
    %261 = vector.shape_cast %260 : vector<8xf32> to vector<8x1xf32>
    %262 = vector.broadcast %261 : vector<8x1xf32> to vector<8x8xf32>
    %263 = arith.subf %259, %262 : vector<8x8xf32>
    %264 = math.exp %263 : vector<8x8xf32>
    %cst_95 = arith.constant dense<0.000000e+00> : vector<8xf32>
    %265 = vector.multi_reduction <add>, %264, %cst_95 [1] : vector<8x8xf32> to vector<8xf32>
    %266 = vector.shape_cast %265 : vector<8xf32> to vector<8x1xf32>
    %267 = tpu.reciprocal %266 {approx = true} : vector<8x1xf32> -> vector<8x1xf32>
    %268 = vector.broadcast %267 : vector<8x1xf32> to vector<8x8xf32>
    %269 = arith.mulf %264, %268 : vector<8x8xf32>
    %cst_96 = arith.constant dense<0.000000e+00> : vector<8x8xf32>
    %270 = tpu.matmul %269, %251, %cst_96 {dimension_numbers = #tpu.dot_dimension_numbers<[1], [0], [0], [1], [0, 0, 1, 1], [], []>} : vector<8x8xf32>, vector<8x8xf32>, vector<8x8xf32> -> vector<8x8xf32>
    %271 = vector.extract_strided_slice %9 {offsets = [16, 0], sizes = [8, 32], strides = [1, 1]} : vector<32x32xf32> to vector<8x32xf32>
    %cst_97 = arith.constant dense<0.000000e+00> : vector<8x32xf32>
    %272 = tpu.matmul %270, %271, %cst_97 {dimension_numbers = #tpu.dot_dimension_numbers<[1], [0], [0], [1], [0, 0, 1, 1], [], []>} : vector<8x8xf32>, vector<8x32xf32>, vector<8x32xf32> -> vector<8x32xf32>
    %273 = arith.addf %248, %272 : vector<8x32xf32>
    %274 = vector.extract_strided_slice %197 {offsets = [0, 24], sizes = [8, 8], strides = [1, 1]} : vector<8x96xf32> to vector<8x8xf32>
    %275 = vector.extract_strided_slice %197 {offsets = [0, 56], sizes = [8, 8], strides = [1, 1]} : vector<8x96xf32> to vector<8x8xf32>
    %276 = vector.extract_strided_slice %197 {offsets = [0, 88], sizes = [8, 8], strides = [1, 1]} : vector<8x96xf32> to vector<8x8xf32>
    %277 = tpu.transpose %275, [1, 0] : vector<8x8xf32> -> vector<8x8xf32>
    %cst_98 = arith.constant dense<0.000000e+00> : vector<8x8xf32>
    %278 = tpu.matmul %274, %277, %cst_98 {dimension_numbers = #tpu.dot_dimension_numbers<[1], [0], [0], [1], [0, 0, 1, 1], [], []>} : vector<8x8xf32>, vector<8x8xf32>, vector<8x8xf32> -> vector<8x8xf32>
    %cst_99 = arith.constant 0.353553385 : f32
    %279 = vector.broadcast %cst_99 : f32 to vector<8x8xf32>
    %280 = arith.mulf %278, %279 : vector<8x8xf32>
    %cst_100 = arith.constant -1.000000e+09 : f32
    %281 = vector.shape_cast %194 : vector<1x8xi1> to vector<1x8xi1>
    %282 = vector.broadcast %281 : vector<1x8xi1> to vector<8x8xi1>
    %283 = vector.broadcast %cst_100 : f32 to vector<8x8xf32>
    %284 = arith.select %282, %283, %280 : vector<8x8xi1>, vector<8x8xf32>
    %cst_101 = arith.constant dense<0xFF800000> : vector<8xf32>
    %285 = vector.multi_reduction <maximumf>, %284, %cst_101 [1] : vector<8x8xf32> to vector<8xf32>
    %286 = vector.shape_cast %285 : vector<8xf32> to vector<8x1xf32>
    %287 = vector.broadcast %286 : vector<8x1xf32> to vector<8x8xf32>
    %288 = arith.subf %284, %287 : vector<8x8xf32>
    %289 = math.exp %288 : vector<8x8xf32>
    %cst_102 = arith.constant dense<0.000000e+00> : vector<8xf32>
    %290 = vector.multi_reduction <add>, %289, %cst_102 [1] : vector<8x8xf32> to vector<8xf32>
    %291 = vector.shape_cast %290 : vector<8xf32> to vector<8x1xf32>
    %292 = tpu.reciprocal %291 {approx = true} : vector<8x1xf32> -> vector<8x1xf32>
    %293 = vector.broadcast %292 : vector<8x1xf32> to vector<8x8xf32>
    %294 = arith.mulf %289, %293 : vector<8x8xf32>
    %cst_103 = arith.constant dense<0.000000e+00> : vector<8x8xf32>
    %295 = tpu.matmul %294, %276, %cst_103 {dimension_numbers = #tpu.dot_dimension_numbers<[1], [0], [0], [1], [0, 0, 1, 1], [], []>} : vector<8x8xf32>, vector<8x8xf32>, vector<8x8xf32> -> vector<8x8xf32>
    %296 = vector.extract_strided_slice %9 {offsets = [24, 0], sizes = [8, 32], strides = [1, 1]} : vector<32x32xf32> to vector<8x32xf32>
    %cst_104 = arith.constant dense<0.000000e+00> : vector<8x32xf32>
    %297 = tpu.matmul %295, %296, %cst_104 {dimension_numbers = #tpu.dot_dimension_numbers<[1], [0], [0], [1], [0, 0, 1, 1], [], []>} : vector<8x8xf32>, vector<8x32xf32>, vector<8x32xf32> -> vector<8x32xf32>
    %298 = arith.addf %273, %297 : vector<8x32xf32>
    %299 = vector.broadcast %1 : vector<1x32xf32> to vector<8x32xf32>
    %300 = arith.addf %298, %299 : vector<8x32xf32>
    %301 = arith.addf %190, %300 : vector<8x32xf32>
    %cst_105 = arith.constant dense<0.000000e+00> : vector<8xf32>
    %302 = vector.multi_reduction <add>, %301, %cst_105 [1] : vector<8x32xf32> to vector<8xf32>
    %303 = vector.shape_cast %302 : vector<8xf32> to vector<8x1xf32>
    %cst_106 = arith.constant 3.200000e+01 : f32
    %304 = vector.broadcast %cst_106 : f32 to vector<8x1xf32>
    %305 = arith.divf %303, %304 : vector<8x1xf32>
    %306 = vector.broadcast %305 : vector<8x1xf32> to vector<8x32xf32>
    %307 = arith.subf %301, %306 : vector<8x32xf32>
    %308 = arith.mulf %307, %307 : vector<8x32xf32>
    %cst_107 = arith.constant dense<0.000000e+00> : vector<8xf32>
    %309 = vector.multi_reduction <add>, %308, %cst_107 [1] : vector<8x32xf32> to vector<8xf32>
    %310 = vector.shape_cast %309 : vector<8xf32> to vector<8x1xf32>
    %cst_108 = arith.constant 3.200000e+01 : f32
    %311 = vector.broadcast %cst_108 : f32 to vector<8x1xf32>
    %312 = arith.divf %310, %311 : vector<8x1xf32>
    %313 = vector.broadcast %305 : vector<8x1xf32> to vector<8x32xf32>
    %314 = arith.subf %301, %313 : vector<8x32xf32>
    %cst_109 = arith.constant 9.99999974E-6 : f32
    %315 = vector.broadcast %cst_109 : f32 to vector<8x1xf32>
    %316 = arith.addf %312, %315 : vector<8x1xf32>
    %317 = math.rsqrt %316 : vector<8x1xf32>
    %318 = vector.broadcast %317 : vector<8x1xf32> to vector<8x32xf32>
    %319 = arith.mulf %314, %318 : vector<8x32xf32>
    %320 = vector.broadcast %2 : vector<1x32xf32> to vector<8x32xf32>
    %321 = arith.mulf %319, %320 : vector<8x32xf32>
    %322 = vector.broadcast %3 : vector<1x32xf32> to vector<8x32xf32>
    %323 = arith.addf %321, %322 : vector<8x32xf32>
    %cst_110 = arith.constant dense<0.000000e+00> : vector<8x64xf32>
    %324 = tpu.matmul %323, %10, %cst_110 {dimension_numbers = #tpu.dot_dimension_numbers<[1], [0], [0], [1], [0, 0, 1, 1], [], []>} : vector<8x32xf32>, vector<32x64xf32>, vector<8x64xf32> -> vector<8x64xf32>
    %325 = vector.broadcast %11 : vector<1x64xf32> to vector<8x64xf32>
    %326 = arith.addf %324, %325 : vector<8x64xf32>
    %cst_111 = arith.constant 0.000000e+00 : f32
    %327 = vector.broadcast %cst_111 : f32 to vector<8x64xf32>
    %328 = arith.maximumf %326, %327 : vector<8x64xf32>
    %cst_112 = arith.constant dense<0.000000e+00> : vector<8x32xf32>
    %329 = tpu.matmul %328, %12, %cst_112 {dimension_numbers = #tpu.dot_dimension_numbers<[1], [0], [0], [1], [0, 0, 1, 1], [], []>} : vector<8x64xf32>, vector<64x32xf32>, vector<8x32xf32> -> vector<8x32xf32>
    %330 = vector.broadcast %4 : vector<1x32xf32> to vector<8x32xf32>
    %331 = arith.addf %329, %330 : vector<8x32xf32>
    %332 = arith.addf %323, %331 : vector<8x32xf32>
    %cst_113 = arith.constant dense<0.000000e+00> : vector<8xf32>
    %333 = vector.multi_reduction <add>, %332, %cst_113 [1] : vector<8x32xf32> to vector<8xf32>
    %334 = vector.shape_cast %333 : vector<8xf32> to vector<8x1xf32>
    %cst_114 = arith.constant 3.200000e+01 : f32
    %335 = vector.broadcast %cst_114 : f32 to vector<8x1xf32>
    %336 = arith.divf %334, %335 : vector<8x1xf32>
    %337 = vector.broadcast %336 : vector<8x1xf32> to vector<8x32xf32>
    %338 = arith.subf %332, %337 : vector<8x32xf32>
    %339 = arith.mulf %338, %338 : vector<8x32xf32>
    %cst_115 = arith.constant dense<0.000000e+00> : vector<8xf32>
    %340 = vector.multi_reduction <add>, %339, %cst_115 [1] : vector<8x32xf32> to vector<8xf32>
    %341 = vector.shape_cast %340 : vector<8xf32> to vector<8x1xf32>
    %cst_116 = arith.constant 3.200000e+01 : f32
    %342 = vector.broadcast %cst_116 : f32 to vector<8x1xf32>
    %343 = arith.divf %341, %342 : vector<8x1xf32>
    %344 = vector.broadcast %336 : vector<8x1xf32> to vector<8x32xf32>
    %345 = arith.subf %332, %344 : vector<8x32xf32>
    %cst_117 = arith.constant 9.99999974E-6 : f32
    %346 = vector.broadcast %cst_117 : f32 to vector<8x1xf32>
    %347 = arith.addf %343, %346 : vector<8x1xf32>
    %348 = math.rsqrt %347 : vector<8x1xf32>
    %349 = vector.broadcast %348 : vector<8x1xf32> to vector<8x32xf32>
    %350 = arith.mulf %345, %349 : vector<8x32xf32>
    %351 = vector.broadcast %5 : vector<1x32xf32> to vector<8x32xf32>
    %352 = arith.mulf %350, %351 : vector<8x32xf32>
    %353 = vector.broadcast %6 : vector<1x32xf32> to vector<8x32xf32>
    %354 = arith.addf %352, %353 : vector<8x32xf32>
    %c1_118 = arith.constant 1 : index
    %c0_119 = arith.constant 0 : index
    %c0_120 = arith.constant 0 : index
    %355 = vector.load %arg10[%c1_118, %c0_119, %c0_120] : memref<2x8x32xf32, #tpu.memory_space<vmem>>, vector<1x8x32xf32>
    %356 = vector.shape_cast %355 : vector<1x8x32xf32> to vector<8x32xf32>
    %357 = vector.shape_cast %354 : vector<8x32xf32> to vector<1x8x32xf32>
    tpu.vector_store %arg10[%c1_118, %c0_119, %c0_120], %357 {strides = array<i32>} : memref<2x8x32xf32, #tpu.memory_space<vmem>>, vector<1x8x32xf32>,
    return
  }
}

</mosaic_0001>

<llo_original>
// kernel: tpu_custom_call.1
$region0: #{tpu_custom_call.1}
  #allocation0 [shape = 'u32[]', space=smem, size = 0x4, offset = 0x4, fixed_abs, tag = 'smem constant byte address 0x4 - core index']
  #allocation1 [shape = 'u32[72,128]{1,0:T(1,128)}', space=vmem, size = 0x9000, scoped, tag = 'internal scratch']
  %s0 = inlined_call_operand.hbm [shape: f32[2,8,32], index: 0, kind: input, shape index: {}]
  %s1 = inlined_call_operand.hbm [shape: f32[2,1,8], index: 1, kind: input, shape index: {}]
  %s2 = inlined_call_operand.hbm [shape: f32[8,32], index: 2, kind: input, shape index: {}]
  %s3 = inlined_call_operand.vmem [shape: f32[32,96], index: 3, kind: input, shape index: {}]
  %s4 = inlined_call_operand.vmem [shape: f32[1,96], index: 4, kind: input, shape index: {}]
  %s5 = inlined_call_operand.vmem [shape: f32[32,32], index: 5, kind: input, shape index: {}]
  %s6 = inlined_call_operand.vmem [shape: f32[32,64], index: 6, kind: input, shape index: {}]
  %s7 = inlined_call_operand.vmem [shape: f32[1,64], index: 7, kind: input, shape index: {}]
  %s8 = inlined_call_operand.vmem [shape: f32[64,32], index: 8, kind: input, shape index: {}]
  %s9 = inlined_call_operand.hbm [shape: f32[6,32], index: 9, kind: input, shape index: {}]
  %s10 = inlined_call_operand.hbm [shape: f32[2,8,32], index: 10, kind: output, shape index: {}]
  %s11 = sld [smem:[#allocation0]]
  $region66: #{tpu_custom_call.1} parent=0
    _
  %s13 = ssub.s32 1, %s11
  %s14 = scalar_select 0, %s13, %s11
  $region1: #{tpu_custom_call.1} parent=0
    #allocation2 [shape = 'u8[8192]{0}', space=vmem, size = 0x2000, scoped, tag = 'input window, operand 0, single buffered']
    #allocation3 [shape = 's32[1]{0}', space=sflag, size = 0x4, scoped, tag = 'scoped memory for tpu_custom_call.1']
    #allocation4 [shape = 's32[1]{0}', space=sflag, size = 0x4, scoped, tag = 'scoped memory for tpu_custom_call.1']
    #allocation5 [shape = 'u8[1024]{0}', space=vmem, size = 0x400, scoped, tag = 'input window, operand 1, single buffered']
    #allocation6 [shape = 's32[1]{0}', space=sflag, size = 0x4, scoped, tag = 'scoped memory for tpu_custom_call.1']
    #allocation7 [shape = 'u8[4096]{0}', space=vmem, size = 0x1000, scoped, tag = 'input window, operand 2, single buffered']
    #allocation8 [shape = 'u8[4096]{0}', space=vmem, size = 0x1000, scoped, tag = 'input window, operand 9, single buffered']
    #allocation9 [shape = 's32[1]{0}', space=sflag, size = 0x4, scoped, tag = 'scoped memory for tpu_custom_call.1']
    #allocation10 [shape = 'u8[8192]{0}', space=vmem, size = 0x2000, scoped, tag = 'output window, operand 0, single buffered']
    %15 = vsyncpa [#allocation3], 0
    %16 = vsyncpa [#allocation6], 0
    %17 = vsyncpa [#allocation9], 0
    %18 = vsyncpa [#allocation4], 0
    // Predicated region
    $region2: #{tpu_custom_call.1} parent=1 // pred_check
      _
    $region3: #{tpu_custom_call.1} parent=1 // pred_check_branch
      %20 = sbr.rel (0) target = $region5
    $region4: #{tpu_custom_call.1} parent=1 // pred_region
      %22 = vsyncadd [#allocation3], 0
      %s23 = sshll.u32 %s0, 4
      %s24 = int_to_ptr.hbm [resolvable:$true] %s23
      %s25 = sshll.u32 [#allocation2], 4
      %s26 = int_to_ptr.vmem [resolvable:$true] %s25
      %31 = dma.hbm_to_vmem [thread:$0]  %s24, 256, %s26, [#allocation3], 128, 128, 8
    $region5: #{tpu_custom_call.1} parent=1 // pred_fallthru
      _
    // Predicated region
    $region6: #{tpu_custom_call.1} parent=1 // pred_check
      _
    $region7: #{tpu_custom_call.1} parent=1 // pred_check_branch
      %33 = sbr.rel (0) target = $region9
    $region8: #{tpu_custom_call.1} parent=1 // pred_region
      %35 = vsyncadd [#allocation6], 0
      %s36 = sshll.u32 %s1, 4
      %s37 = int_to_ptr.hbm [resolvable:$true] %s36
      %s38 = sshll.u32 [#allocation5], 4
      %s39 = int_to_ptr.vmem [resolvable:$true] %s38
      %44 = dma.hbm_to_vmem [thread:$0]  %s37, 32, %s39, [#allocation6], 16, 16, 1
    $region9: #{tpu_custom_call.1} parent=1 // pred_fallthru
      _
    // Predicated region
    $region10: #{tpu_custom_call.1} parent=1 // pred_check
      _
    $region11: #{tpu_custom_call.1} parent=1 // pred_check_branch
      %46 = sbr.rel (0) target = $region13
    $region12: #{tpu_custom_call.1} parent=1 // pred_region
      %48 = vsyncadd [#allocation6], 0
      %s50 = sshll.u32 %s2, 4
      %s51 = int_to_ptr.hbm [resolvable:$true] %s50
      %s52 = sshll.u32 [#allocation7], 4
      %s53 = int_to_ptr.vmem [resolvable:$true] %s52
      %55 = dma.hbm_to_vmem [thread:$0]  %s51, 128, %s53, [#allocation6]
    $region13: #{tpu_custom_call.1} parent=1 // pred_fallthru
      _
    // Predicated region
    $region14: #{tpu_custom_call.1} parent=1 // pred_check
      _
    $region15: #{tpu_custom_call.1} parent=1 // pred_check_branch
      %57 = sbr.rel (0) target = $region17
    $region16: #{tpu_custom_call.1} parent=1 // pred_region
      _
    $region17: #{tpu_custom_call.1} parent=1 // pred_fallthru
      _
    // Predicated region
    $region18: #{tpu_custom_call.1} parent=1 // pred_check
      _
    $region19: #{tpu_custom_call.1} parent=1 // pred_check_branch
      %59 = sbr.rel (0) target = $region21
    $region20: #{tpu_custom_call.1} parent=1 // pred_region
      _
    $region21: #{tpu_custom_call.1} parent=1 // pred_fallthru
      _
    // Predicated region
    $region22: #{tpu_custom_call.1} parent=1 // pred_check
      _
    $region23: #{tpu_custom_call.1} parent=1 // pred_check_branch
      %61 = sbr.rel (0) target = $region25
    $region24: #{tpu_custom_call.1} parent=1 // pred_region
      _
    $region25: #{tpu_custom_call.1} parent=1 // pred_fallthru
      _
    // Predicated region
    $region26: #{tpu_custom_call.1} parent=1 // pred_check
      _
    $region27: #{tpu_custom_call.1} parent=1 // pred_check_branch
      %63 = sbr.rel (0) target = $region29
    $region28: #{tpu_custom_call.1} parent=1 // pred_region
      _
    $region29: #{tpu_custom_call.1} parent=1 // pred_fallthru
      _
    // Predicated region
    $region30: #{tpu_custom_call.1} parent=1 // pred_check
      _
    $region31: #{tpu_custom_call.1} parent=1 // pred_check_branch
      %65 = sbr.rel (0) target = $region33
    $region32: #{tpu_custom_call.1} parent=1 // pred_region
      _
    $region33: #{tpu_custom_call.1} parent=1 // pred_fallthru
      _
    // Predicated region
    $region34: #{tpu_custom_call.1} parent=1 // pred_check
      _
    $region35: #{tpu_custom_call.1} parent=1 // pred_check_branch
      %67 = sbr.rel (0) target = $region37
    $region36: #{tpu_custom_call.1} parent=1 // pred_region
      _
    $region37: #{tpu_custom_call.1} parent=1 // pred_fallthru
      _
    // Predicated region
    $region38: #{tpu_custom_call.1} parent=1 // pred_check
      _
    $region39: #{tpu_custom_call.1} parent=1 // pred_check_branch
      %69 = sbr.rel (0) target = $region41
    $region40: #{tpu_custom_call.1} parent=1 // pred_region
      %71 = vsyncadd [#allocation9], 0
      %s73 = sshll.u32 %s9, 4
      %s74 = int_to_ptr.hbm [resolvable:$true] %s73
      %s75 = sshll.u32 [#allocation8], 4
      %s76 = int_to_ptr.vmem [resolvable:$true] %s75
      %78 = dma.hbm_to_vmem [thread:$0]  %s74, 128, %s76, [#allocation9]
    $region41: #{tpu_custom_call.1} parent=1 // pred_fallthru
      _
    // Predicated region
    $region42: #{tpu_custom_call.1} parent=1 // pred_check
      _
    $region43: #{tpu_custom_call.1} parent=1 // pred_check_branch
      %80 = sbr.rel (0) target = $region45
    $region44: #{tpu_custom_call.1} parent=1 // pred_region
      %82 = dma.done [#allocation3], 256
    $region45: #{tpu_custom_call.1} parent=1 // pred_fallthru
      _
    // Predicated region
    $region46: #{tpu_custom_call.1} parent=1 // pred_check
      _
    $region47: #{tpu_custom_call.1} parent=1 // pred_check_branch
      %84 = sbr.rel (0) target = $region49
    $region48: #{tpu_custom_call.1} parent=1 // pred_region
      %86 = dma.done [#allocation6], 32
    $region49: #{tpu_custom_call.1} parent=1 // pred_fallthru
      _
    // Predicated region
    $region50: #{tpu_custom_call.1} parent=1 // pred_check
      _
    $region51: #{tpu_custom_call.1} parent=1 // pred_check_branch
      %88 = sbr.rel (0) target = $region53
    $region52: #{tpu_custom_call.1} parent=1 // pred_region
      %90 = dma.done [#allocation6], 128
    $region53: #{tpu_custom_call.1} parent=1 // pred_fallthru
      _
    // Predicated region
    $region54: #{tpu_custom_call.1} parent=1 // pred_check
      _
    $region55: #{tpu_custom_call.1} parent=1 // pred_check_branch
      %92 = sbr.rel (0) target = $region57
    $region56: #{tpu_custom_call.1} parent=1 // pred_region
      %94 = dma.done [#allocation9], 128
    $region57: #{tpu_custom_call.1} parent=1 // pred_fallthru
      _
    %v95 = vld [vmem:[#allocation8] sm:$0x3f]
    %v96 = vld [vmem:[%s3] sm:$0xff]
    %v97 = vld [vmem:[%s3 + $0x8] sm:$0xff]
    %v98 = vld [vmem:[%s3 + $0x10] sm:$0xff]
    %v99 = vld [vmem:[%s3 + $0x18] sm:$0xff]
    %v100 = vld [vmem:[%s4] sm:$0x1]
    %v101 = vld [vmem:[%s5] sm:$0xff]
    %v102 = vld [vmem:[%s5 + $0x8] sm:$0xff]
    %v103 = vld [vmem:[%s5 + $0x10] sm:$0xff]
    %v104 = vld [vmem:[%s5 + $0x18] sm:$0xff]
    %v105 = vld [vmem:[%s6] sm:$0xff]
    %v106 = vld [vmem:[%s6 + $0x8] sm:$0xff]
    %v107 = vld [vmem:[%s6 + $0x10] sm:$0xff]
    %v108 = vld [vmem:[%s6 + $0x18] sm:$0xff]
    %v109 = vld [vmem:[%s7] sm:$0x1]
    %v110 = vld [vmem:[%s8] sm:$0xff]
    %v111 = vld [vmem:[%s8 + $0x8] sm:$0xff]
    %v112 = vld [vmem:[%s8 + $0x10] sm:$0xff]
    %v113 = vld [vmem:[%s8 + $0x18] sm:$0xff]
    %v114 = vld [vmem:[%s8 + $0x20] sm:$0xff]
    %v115 = vld [vmem:[%s8 + $0x28] sm:$0xff]
    %v116 = vld [vmem:[%s8 + $0x30] sm:$0xff]
    %v117 = vld [vmem:[%s8 + $0x38] sm:$0xff]
    %v118 = vld [vmem:[#allocation7] sm:$0xff]
    %v119 = vld [vmem:[#allocation2] sm:$0xff]
    %v120 = vmul.f32 %v119, 5.656854
    %v121 = vadd.f32 %v120, %v118
    %v122 = vld [vmem:[#allocation5] sm:$0x1]
    %vm123 = vcmp.eq.f32.partialorder %v122, 0.0
    %v125 = vperm.slane %v100, 0
    %vm127 = vcmask 261120
    %v129 = vsel %vm127, %v121, 0
    %131 = vmatpush.msra.mxu0 0.0
    %132 = vmatpush.msra.mxu0 0.0
    %133 = vmatpush.msra.mxu0 0.0
    %134 = vmatpush.msra.mxu0 0.0
    %135 = vmatpush.msra.mxu0 0.0
    %136 = vmatpush.msra.mxu0 0.0
    %137 = vmatpush.msra.mxu0 0.0
    %138 = vmatpush.msra.mxu0 0.0
    %139 = vmatpush.msra.mxu0 0.0
    %140 = vmatpush.msra.mxu0 0.0
    %141 = vmatpush.msra.mxu0 0.0
    %142 = vmatpush.msra.mxu0 0.0
    %143 = vmatpush.msra.mxu0 %v99
    %144 = vmatpush.msra.mxu0 %v98
    %145 = vmatpush.msra.mxu0 %v97
    %146 = vmatpush.msra.mxu0 %v96
    %147 = vmatmul.f32.gmra.mxu0 %v129
    %v148 = vpop.f32.mrf.mxu0
    %v149 = vadd.f32 %v125, %v148
    %150 = vdwg.mxu0
    %152 = vrot.lane.b32.xlu0 %v149, 96
    %v153 = vpop.permute.xlu0 %152
    %vm154 = vcmask 64512
    %v155 = vsel %vm154, %v149, 0
    %v157 = vsel %vm154, %v153, 0
    %159 = vmatpush.xpose.msra.mxu0 0.0
    %160 = vmatpush.xpose.msra.mxu0 0.0
    %161 = vmatpush.xpose.msra.mxu0 0.0
    %162 = vmatpush.xpose.msra.mxu0 0.0
    %163 = vmatpush.xpose.msra.mxu0 0.0
    %164 = vmatpush.xpose.msra.mxu0 0.0
    %165 = vmatpush.xpose.msra.mxu0 0.0
    %166 = vmatpush.xpose.msra.mxu0 0.0
    %167 = vmatpush.xpose.msra.mxu0 0.0
    %168 = vmatpush.xpose.msra.mxu0 0.0
    %169 = vmatpush.xpose.msra.mxu0 0.0
    %170 = vmatpush.xpose.msra.mxu0 0.0
    %171 = vmatpush.xpose.msra.mxu0 0.0
    %172 = vmatpush.xpose.msra.mxu0 0.0
    %173 = vmatpush.xpose.msra.mxu0 0.0
    %174 = vmatpush.xpose.msra.mxu0 %v157
    %175 = vmatmul.f32.gmra.mxu0 %v155
    %v176 = vpop.f32.mrf.mxu0
    %v177 = vadd.f32 0.0, %v176
    %178 = vdwg.mxu0
    %v179 = vmul.f32 %v177, 0.35355338
    %v180 = vsel %vm123, 1, 0
    %v181 = vperm.slane %v180, 0
    %vm182 = vcmp.eq.s32.totalorder %v181, 1
    %v183 = vsel %vm182, -1e+09, %v179
    %v184 = vsel %vm154, %v183, -inf
    %185 = vmax.xlane.f32.xlu0 %v184
    %v186 = vpop.xlane.xlu0 %185
    %v187 = vsub.f32 %v183, %v186
    %v188 = vmul.f32 %v187, 1.442695
    %v189 = vpow.pop %v188
    %v190 = vsel %vm154, %v189, 0.0
    %191 = vadd.xlane.f32.xlu0 %v190
    %v192 = vpop.xlane.xlu0 %191
    %v193 = vrcp.pop %v192
    %v194 = vmul.f32 %v189, %v193
    %195 = vrot.lane.b32.xlu0 %v149, 64
    %v196 = vpop.permute.xlu0 %195
    %v199 = vsel %vm154, %v194, 0
    %201 = vmatpush.msra.mxu0 0.0
    %202 = vmatpush.msra.mxu0 0.0
    %203 = vmatpush.msra.mxu0 0.0
    %204 = vmatpush.msra.mxu0 0.0
    %205 = vmatpush.msra.mxu0 0.0
    %206 = vmatpush.msra.mxu0 0.0
    %207 = vmatpush.msra.mxu0 0.0
    %208 = vmatpush.msra.mxu0 0.0
    %209 = vmatpush.msra.mxu0 0.0
    %210 = vmatpush.msra.mxu0 0.0
    %211 = vmatpush.msra.mxu0 0.0
    %212 = vmatpush.msra.mxu0 0.0
    %213 = vmatpush.msra.mxu0 0.0
    %214 = vmatpush.msra.mxu0 0.0
    %215 = vmatpush.msra.mxu0 0.0
    %216 = vmatpush.msra.mxu0 %v196
    %217 = vmatmul.f32.gmra.mxu0 %v199
    %v218 = vpop.f32.mrf.mxu0
    %v219 = vadd.f32 0.0, %v218
    %220 = vdwg.mxu0
    %221 = vrot.lane.b32.xlu0 %v149, 120
    %v222 = vpop.permute.xlu0 %221
    %223 = vrot.lane.b32.xlu0 %v149, 88
    %v224 = vpop.permute.xlu0 %223
    %v225 = vsel %vm154, %v222, 0
    %v227 = vsel %vm154, %v224, 0
    %229 = vmatpush.xpose.msra.mxu0 0.0
    %230 = vmatpush.xpose.msra.mxu0 0.0
    %231 = vmatpush.xpose.msra.mxu0 0.0
    %232 = vmatpush.xpose.msra.mxu0 0.0
    %233 = vmatpush.xpose.msra.mxu0 0.0
    %234 = vmatpush.xpose.msra.mxu0 0.0
    %235 = vmatpush.xpose.msra.mxu0 0.0
    %236 = vmatpush.xpose.msra.mxu0 0.0
    %237 = vmatpush.xpose.msra.mxu0 0.0
    %238 = vmatpush.xpose.msra.mxu0 0.0
    %239 = vmatpush.xpose.msra.mxu0 0.0
    %240 = vmatpush.xpose.msra.mxu0 0.0
    %241 = vmatpush.xpose.msra.mxu0 0.0
    %242 = vmatpush.xpose.msra.mxu0 0.0
    %243 = vmatpush.xpose.msra.mxu0 0.0
    %244 = vmatpush.xpose.msra.mxu0 %v227
    %245 = vmatmul.f32.gmra.mxu0 %v225
    %v246 = vpop.f32.mrf.mxu0
    %v247 = vadd.f32 0.0, %v246
    %248 = vdwg.mxu0
    %v249 = vmul.f32 %v247, 0.35355338
    %v250 = vsel %vm182, -1e+09, %v249
    %v251 = vsel %vm154, %v250, -inf
    %252 = vmax.xlane.f32.xlu0 %v251
    %v253 = vpop.xlane.xlu0 %252
    %v254 = vsub.f32 %v250, %v253
    %v255 = vmul.f32 %v254, 1.442695
    %v256 = vpow.pop %v255
    %v257 = vsel %vm154, %v256, 0.0
    %258 = vadd.xlane.f32.xlu0 %v257
    %v259 = vpop.xlane.xlu0 %258
    %v260 = vrcp.pop %v259
    %v261 = vmul.f32 %v256, %v260
    %262 = vrot.lane.b32.xlu0 %v149, 56
    %v263 = vpop.permute.xlu0 %262
    %v266 = vsel %vm154, %v261, 0
    %268 = vmatpush.msra.mxu0 0.0
    %269 = vmatpush.msra.mxu0 0.0
    %270 = vmatpush.msra.mxu0 0.0
    %271 = vmatpush.msra.mxu0 0.0
    %272 = vmatpush.msra.mxu0 0.0
    %273 = vmatpush.msra.mxu0 0.0
    %274 = vmatpush.msra.mxu0 0.0
    %275 = vmatpush.msra.mxu0 0.0
    %276 = vmatpush.msra.mxu0 0.0
    %277 = vmatpush.msra.mxu0 0.0
    %278 = vmatpush.msra.mxu0 0.0
    %279 = vmatpush.msra.mxu0 0.0
    %280 = vmatpush.msra.mxu0 0.0
    %281 = vmatpush.msra.mxu0 0.0
    %282 = vmatpush.msra.mxu0 0.0
    %283 = vmatpush.msra.mxu0 %v263
    %284 = vmatmul.f32.gmra.mxu0 %v266
    %v285 = vpop.f32.mrf.mxu0
    %v286 = vadd.f32 0.0, %v285
    %287 = vdwg.mxu0
    %v289 = vsel %vm154, %v286, 0
    %291 = vmatpush.msra.mxu0 0.0
    %292 = vmatpush.msra.mxu0 0.0
    %293 = vmatpush.msra.mxu0 0.0
    %294 = vmatpush.msra.mxu0 0.0
    %295 = vmatpush.msra.mxu0 0.0
    %296 = vmatpush.msra.mxu0 0.0
    %297 = vmatpush.msra.mxu0 0.0
    %298 = vmatpush.msra.mxu0 0.0
    %299 = vmatpush.msra.mxu0 0.0
    %300 = vmatpush.msra.mxu0 0.0
    %301 = vmatpush.msra.mxu0 0.0
    %302 = vmatpush.msra.mxu0 0.0
    %303 = vmatpush.msra.mxu0 0.0
    %304 = vmatpush.msra.mxu0 0.0
    %305 = vmatpush.msra.mxu0 0.0
    %306 = vmatpush.msra.mxu0 %v102
    %307 = vmatmul.f32.gmra.mxu0 %v289
    %v308 = vpop.f32.mrf.mxu0
    %v309 = vadd.f32 0.0, %v308
    %310 = vdwg.mxu0
    %v312 = vsel %vm154, %v219, 0
    %314 = vmatpush.msra.mxu0 0.0
    %315 = vmatpush.msra.mxu0 0.0
    %316 = vmatpush.msra.mxu0 0.0
    %317 = vmatpush.msra.mxu0 0.0
    %318 = vmatpush.msra.mxu0 0.0
    %319 = vmatpush.msra.mxu0 0.0
    %320 = vmatpush.msra.mxu0 0.0
    %321 = vmatpush.msra.mxu0 0.0
    %322 = vmatpush.msra.mxu0 0.0
    %323 = vmatpush.msra.mxu0 0.0
    %324 = vmatpush.msra.mxu0 0.0
    %325 = vmatpush.msra.mxu0 0.0
    %326 = vmatpush.msra.mxu0 0.0
    %327 = vmatpush.msra.mxu0 0.0
    %328 = vmatpush.msra.mxu0 0.0
    %329 = vmatpush.msra.mxu0 %v101
    %330 = vmatmul.f32.gmra.mxu0 %v312
    %v331 = vpop.f32.mrf.mxu0
    %v332 = vadd.f32 %v309, %v331
    %333 = vdwg.mxu0
    %334 = vrot.lane.b32.xlu0 %v149, 112
    %v335 = vpop.permute.xlu0 %334
    %336 = vrot.lane.b32.xlu0 %v149, 80
    %v337 = vpop.permute.xlu0 %336
    %v338 = vsel %vm154, %v335, 0
    %v340 = vsel %vm154, %v337, 0
    %342 = vmatpush.xpose.msra.mxu0 0.0
    %343 = vmatpush.xpose.msra.mxu0 0.0
    %344 = vmatpush.xpose.msra.mxu0 0.0
    %345 = vmatpush.xpose.msra.mxu0 0.0
    %346 = vmatpush.xpose.msra.mxu0 0.0
    %347 = vmatpush.xpose.msra.mxu0 0.0
    %348 = vmatpush.xpose.msra.mxu0 0.0
    %349 = vmatpush.xpose.msra.mxu0 0.0
    %350 = vmatpush.xpose.msra.mxu0 0.0
    %351 = vmatpush.xpose.msra.mxu0 0.0
    %352 = vmatpush.xpose.msra.mxu0 0.0
    %353 = vmatpush.xpose.msra.mxu0 0.0
    %354 = vmatpush.xpose.msra.mxu0 0.0
    %355 = vmatpush.xpose.msra.mxu0 0.0
    %356 = vmatpush.xpose.msra.mxu0 0.0
    %357 = vmatpush.xpose.msra.mxu0 %v340
    %358 = vmatmul.f32.gmra.mxu0 %v338
    %v359 = vpop.f32.mrf.mxu0
    %v360 = vadd.f32 0.0, %v359
    %361 = vdwg.mxu0
    %v362 = vmul.f32 %v360, 0.35355338
    %v363 = vsel %vm182, -1e+09, %v362
    %v364 = vsel %vm154, %v363, -inf
    %365 = vmax.xlane.f32.xlu0 %v364
    %v366 = vpop.xlane.xlu0 %365
    %v367 = vsub.f32 %v363, %v366
    %v368 = vmul.f32 %v367, 1.442695
    %v369 = vpow.pop %v368
    %v370 = vsel %vm154, %v369, 0.0
    %371 = vadd.xlane.f32.xlu0 %v370
    %v372 = vpop.xlane.xlu0 %371
    %v373 = vrcp.pop %v372
    %v374 = vmul.f32 %v369, %v373
    %375 = vrot.lane.b32.xlu0 %v149, 48
    %v376 = vpop.permute.xlu0 %375
    %v379 = vsel %vm154, %v374, 0
    %381 = vmatpush.msra.mxu0 0.0
    %382 = vmatpush.msra.mxu0 0.0
    %383 = vmatpush.msra.mxu0 0.0
    %384 = vmatpush.msra.mxu0 0.0
    %385 = vmatpush.msra.mxu0 0.0
    %386 = vmatpush.msra.mxu0 0.0
    %387 = vmatpush.msra.mxu0 0.0
    %388 = vmatpush.msra.mxu0 0.0
    %389 = vmatpush.msra.mxu0 0.0
    %390 = vmatpush.msra.mxu0 0.0
    %391 = vmatpush.msra.mxu0 0.0
    %392 = vmatpush.msra.mxu0 0.0
    %393 = vmatpush.msra.mxu0 0.0
    %394 = vmatpush.msra.mxu0 0.0
    %395 = vmatpush.msra.mxu0 0.0
    %396 = vmatpush.msra.mxu0 %v376
    %397 = vmatmul.f32.gmra.mxu0 %v379
    %v398 = vpop.f32.mrf.mxu0
    %v399 = vadd.f32 0.0, %v398
    %400 = vdwg.mxu0
    %v402 = vsel %vm154, %v399, 0
    %404 = vmatpush.msra.mxu0 0.0
    %405 = vmatpush.msra.mxu0 0.0
    %406 = vmatpush.msra.mxu0 0.0
    %407 = vmatpush.msra.mxu0 0.0
    %408 = vmatpush.msra.mxu0 0.0
    %409 = vmatpush.msra.mxu0 0.0
    %410 = vmatpush.msra.mxu0 0.0
    %411 = vmatpush.msra.mxu0 0.0
    %412 = vmatpush.msra.mxu0 0.0
    %413 = vmatpush.msra.mxu0 0.0
    %414 = vmatpush.msra.mxu0 0.0
    %415 = vmatpush.msra.mxu0 0.0
    %416 = vmatpush.msra.mxu0 0.0
    %417 = vmatpush.msra.mxu0 0.0
    %418 = vmatpush.msra.mxu0 0.0
    %419 = vmatpush.msra.mxu0 %v103
    %420 = vmatmul.f32.gmra.mxu0 %v402
    %v421 = vpop.f32.mrf.mxu0
    %v422 = vadd.f32 0.0, %v421
    %423 = vdwg.mxu0
    %v424 = vadd.f32 %v332, %v422
    %425 = vrot.lane.b32.xlu0 %v149, 104
    %v426 = vpop.permute.xlu0 %425
    %427 = vrot.lane.b32.xlu0 %v149, 72
    %v428 = vpop.permute.xlu0 %427
    %v429 = vsel %vm154, %v426, 0
    %v431 = vsel %vm154, %v428, 0
    %433 = vmatpush.xpose.msra.mxu0 0.0
    %434 = vmatpush.xpose.msra.mxu0 0.0
    %435 = vmatpush.xpose.msra.mxu0 0.0
    %436 = vmatpush.xpose.msra.mxu0 0.0
    %437 = vmatpush.xpose.msra.mxu0 0.0
    %438 = vmatpush.xpose.msra.mxu0 0.0
    %439 = vmatpush.xpose.msra.mxu0 0.0
    %440 = vmatpush.xpose.msra.mxu0 0.0
    %441 = vmatpush.xpose.msra.mxu0 0.0
    %442 = vmatpush.xpose.msra.mxu0 0.0
    %443 = vmatpush.xpose.msra.mxu0 0.0
    %444 = vmatpush.xpose.msra.mxu0 0.0
    %445 = vmatpush.xpose.msra.mxu0 0.0
    %446 = vmatpush.xpose.msra.mxu0 0.0
    %447 = vmatpush.xpose.msra.mxu0 0.0
    %448 = vmatpush.xpose.msra.mxu0 %v431
    %449 = vmatmul.f32.gmra.mxu0 %v429
    %v450 = vpop.f32.mrf.mxu0
    %v451 = vadd.f32 0.0, %v450
    %452 = vdwg.mxu0
    %v453 = vmul.f32 %v451, 0.35355338
    %v454 = vsel %vm182, -1e+09, %v453
    %v455 = vsel %vm154, %v454, -inf
    %456 = vmax.xlane.f32.xlu0 %v455
    %v457 = vpop.xlane.xlu0 %456
    %v458 = vsub.f32 %v454, %v457
    %v459 = vmul.f32 %v458, 1.442695
    %v460 = vpow.pop %v459
    %v461 = vsel %vm154, %v460, 0.0
    %462 = vadd.xlane.f32.xlu0 %v461
    %v463 = vpop.xlane.xlu0 %462
    %v464 = vrcp.pop %v463
    %v465 = vmul.f32 %v460, %v464
    %466 = vrot.lane.b32.xlu0 %v149, 40
    %v467 = vpop.permute.xlu0 %466
    %v470 = vsel %vm154, %v465, 0
    %472 = vmatpush.msra.mxu0 0.0
    %473 = vmatpush.msra.mxu0 0.0
    %474 = vmatpush.msra.mxu0 0.0
    %475 = vmatpush.msra.mxu0 0.0
    %476 = vmatpush.msra.mxu0 0.0
    %477 = vmatpush.msra.mxu0 0.0
    %478 = vmatpush.msra.mxu0 0.0
    %479 = vmatpush.msra.mxu0 0.0
    %480 = vmatpush.msra.mxu0 0.0
    %481 = vmatpush.msra.mxu0 0.0
    %482 = vmatpush.msra.mxu0 0.0
    %483 = vmatpush.msra.mxu0 0.0
    %484 = vmatpush.msra.mxu0 0.0
    %485 = vmatpush.msra.mxu0 0.0
    %486 = vmatpush.msra.mxu0 0.0
    %487 = vmatpush.msra.mxu0 %v467
    %488 = vmatmul.f32.gmra.mxu0 %v470
    %v489 = vpop.f32.mrf.mxu0
    %v490 = vadd.f32 0.0, %v489
    %491 = vdwg.mxu0
    %v493 = vsel %vm154, %v490, 0
    %495 = vmatpush.msra.mxu0 0.0
    %496 = vmatpush.msra.mxu0 0.0
    %497 = vmatpush.msra.mxu0 0.0
    %498 = vmatpush.msra.mxu0 0.0
    %499 = vmatpush.msra.mxu0 0.0
    %500 = vmatpush.msra.mxu0 0.0
    %501 = vmatpush.msra.mxu0 0.0
    %502 = vmatpush.msra.mxu0 0.0
    %503 = vmatpush.msra.mxu0 0.0
    %504 = vmatpush.msra.mxu0 0.0
    %505 = vmatpush.msra.mxu0 0.0
    %506 = vmatpush.msra.mxu0 0.0
    %507 = vmatpush.msra.mxu0 0.0
    %508 = vmatpush.msra.mxu0 0.0
    %509 = vmatpush.msra.mxu0 0.0
    %510 = vmatpush.msra.mxu0 %v104
    %511 = vmatmul.f32.gmra.mxu0 %v493
    %v512 = vpop.f32.mrf.mxu0
    %v513 = vadd.f32 0.0, %v512
    %514 = vdwg.mxu0
    %v515 = vadd.f32 %v424, %v513
    %v516 = vperm.slane %v95, 0
    %v517 = vadd.f32 %v515, %v516
    %v518 = vadd.f32 %v121, %v517
    %v519 = vsel %vm127, %v518, 0.0
    %520 = vadd.xlane.f32.xlu0 %v519
    %v521 = vpop.xlane.xlu0 %520
    %v522 = vrcp.pop 32.0
    %v523 = vmul.f32 32.0, %v522
    %v524 = vsub.f32 1.0, %v523
    %v525 = vmul.f32 %v522, %v524
    %v526 = vadd.f32 %v522, %v525
    %vm527 = vweird.f32 %v522
    %v528 = vsel %vm527, %v522, %v526
    %v529 = vmul.f32 %v521, %v528
    %v530 = vsub.f32 %v518, %v529
    %v531 = vmul.f32 %v530, %v530
    %v532 = vsel %vm127, %v531, 0.0
    %533 = vadd.xlane.f32.xlu0 %v532
    %v534 = vpop.xlane.xlu0 %533
    %v535 = vmul.f32 %v534, %v528
    %v536 = vadd.f32 %v535, 1e-05
    %v537 = vrsqrt.pop %v536
    %v538 = vmul.f32 %v537, %v536
    %v539 = vmul.f32 %v538, %v537
    %v540 = vmul.f32 0.5, %v539
    %v541 = vsub.f32 1.5, %v540
    %v542 = vmul.f32 %v537, %v541
    %vm543 = vweird.f32 %v536
    %vm544 = vweird.f32 %v537
    %vm545 = vmor %vm543, %vm544
    %v546 = vsel %vm545, %v537, %v542
    %v547 = vmul.f32 %v530, %v546
    %v548 = vperm.slane %v95, 1
    %v549 = vmul.f32 %v547, %v548
    %v550 = vperm.slane %v95, 2
    %v551 = vadd.f32 %v549, %v550
    %v553 = vperm.slane %v109, 0
    %v556 = vsel %vm127, %v551, 0
    %558 = vmatpush.msra.mxu0 0.0
    %559 = vmatpush.msra.mxu0 0.0
    %560 = vmatpush.msra.mxu0 0.0
    %561 = vmatpush.msra.mxu0 0.0
    %562 = vmatpush.msra.mxu0 0.0
    %563 = vmatpush.msra.mxu0 0.0
    %564 = vmatpush.msra.mxu0 0.0
    %565 = vmatpush.msra.mxu0 0.0
    %566 = vmatpush.msra.mxu0 0.0
    %567 = vmatpush.msra.mxu0 0.0
    %568 = vmatpush.msra.mxu0 0.0
    %569 = vmatpush.msra.mxu0 0.0
    %570 = vmatpush.msra.mxu0 %v108
    %571 = vmatpush.msra.mxu0 %v107
    %572 = vmatpush.msra.mxu0 %v106
    %573 = vmatpush.msra.mxu0 %v105
    %574 = vmatmul.f32.gmra.mxu0 %v556
    %v575 = vpop.f32.mrf.mxu0
    %v576 = vadd.f32 %v553, %v575
    %577 = vdwg.mxu0
    %v578 = vmax.f32 %v576, 0.0
    %v579 = vperm.slane %v95, 3
    %vm580 = vcmask 523264
    %v582 = vsel %vm580, %v578, 0
    %584 = vmatpush.msra.mxu0 0.0
    %585 = vmatpush.msra.mxu0 0.0
    %586 = vmatpush.msra.mxu0 0.0
    %587 = vmatpush.msra.mxu0 0.0
    %588 = vmatpush.msra.mxu0 0.0
    %589 = vmatpush.msra.mxu0 0.0
    %590 = vmatpush.msra.mxu0 0.0
    %591 = vmatpush.msra.mxu0 0.0
    %592 = vmatpush.msra.mxu0 %v117
    %593 = vmatpush.msra.mxu0 %v116
    %594 = vmatpush.msra.mxu0 %v115
    %595 = vmatpush.msra.mxu0 %v114
    %596 = vmatpush.msra.mxu0 %v113
    %597 = vmatpush.msra.mxu0 %v112
    %598 = vmatpush.msra.mxu0 %v111
    %599 = vmatpush.msra.mxu0 %v110
    %600 = vmatmul.f32.gmra.mxu0 %v582
    %v601 = vpop.f32.mrf.mxu0
    %v602 = vadd.f32 %v579, %v601
    %603 = vdwg.mxu0
    %v604 = vadd.f32 %v551, %v602
    %v605 = vsel %vm127, %v604, 0.0
    %606 = vadd.xlane.f32.xlu0 %v605
    %v607 = vpop.xlane.xlu0 %606
    %v608 = vmul.f32 %v607, %v528
    %v609 = vsub.f32 %v604, %v608
    %v610 = vmul.f32 %v609, %v609
    %v611 = vsel %vm127, %v610, 0.0
    %612 = vadd.xlane.f32.xlu0 %v611
    %v613 = vpop.xlane.xlu0 %612
    %v614 = vmul.f32 %v613, %v528
    %v615 = vadd.f32 %v614, 1e-05
    %v616 = vrsqrt.pop %v615
    %v617 = vmul.f32 %v616, %v615
    %v618 = vmul.f32 %v617, %v616
    %v619 = vmul.f32 0.5, %v618
    %v620 = vsub.f32 1.5, %v619
    %v621 = vmul.f32 %v616, %v620
    %vm622 = vweird.f32 %v615
    %vm623 = vweird.f32 %v616
    %vm624 = vmor %vm622, %vm623
    %v625 = vsel %vm624, %v616, %v621
    %v626 = vmul.f32 %v609, %v625
    %v627 = vperm.slane %v95, 4
    %v628 = vmul.f32 %v626, %v627
    %v629 = vperm.slane %v95, 5
    %v630 = vadd.f32 %v628, %v629
    %631 = vst.msk [vmem:[#allocation10] sm:$0xff] %vm127, %v630
    %s632 = scalar_lea.vmem [#allocation2], 8
    %v633 = vld [vmem:[%s632] sm:$0xff]
    %v634 = vmul.f32 %v633, 5.656854
    %v635 = vadd.f32 %v634, %v118
    %s636 = scalar_lea.vmem [#allocation5], 1
    %v637 = vld [vmem:[%s636] sm:$0x1]
    %vm638 = vcmp.eq.f32.partialorder %v637, 0.0
    %v640 = vsel %vm127, %v635, 0
    %642 = vmatpush.msra.mxu0 0.0
    %643 = vmatpush.msra.mxu0 0.0
    %644 = vmatpush.msra.mxu0 0.0
    %645 = vmatpush.msra.mxu0 0.0
    %646 = vmatpush.msra.mxu0 0.0
    %647 = vmatpush.msra.mxu0 0.0
    %648 = vmatpush.msra.mxu0 0.0
    %649 = vmatpush.msra.mxu0 0.0
    %650 = vmatpush.msra.mxu0 0.0
    %651 = vmatpush.msra.mxu0 0.0
    %652 = vmatpush.msra.mxu0 0.0
    %653 = vmatpush.msra.mxu0 0.0
    %654 = vmatpush.msra.mxu0 %v99
    %655 = vmatpush.msra.mxu0 %v98
    %656 = vmatpush.msra.mxu0 %v97
    %657 = vmatpush.msra.mxu0 %v96
    %658 = vmatmul.f32.gmra.mxu0 %v640
    %v659 = vpop.f32.mrf.mxu0
    %v660 = vadd.f32 %v125, %v659
    %661 = vdwg.mxu0
    %663 = vrot.lane.b32.xlu0 %v660, 96
    %v664 = vpop.permute.xlu0 %663
    %v665 = vsel %vm154, %v660, 0
    %v667 = vsel %vm154, %v664, 0
    %669 = vmatpush.xpose.msra.mxu0 0.0
    %670 = vmatpush.xpose.msra.mxu0 0.0
    %671 = vmatpush.xpose.msra.mxu0 0.0
    %672 = vmatpush.xpose.msra.mxu0 0.0
    %673 = vmatpush.xpose.msra.mxu0 0.0
    %674 = vmatpush.xpose.msra.mxu0 0.0
    %675 = vmatpush.xpose.msra.mxu0 0.0
    %676 = vmatpush.xpose.msra.mxu0 0.0
    %677 = vmatpush.xpose.msra.mxu0 0.0
    %678 = vmatpush.xpose.msra.mxu0 0.0
    %679 = vmatpush.xpose.msra.mxu0 0.0
    %680 = vmatpush.xpose.msra.mxu0 0.0
    %681 = vmatpush.xpose.msra.mxu0 0.0
    %682 = vmatpush.xpose.msra.mxu0 0.0
    %683 = vmatpush.xpose.msra.mxu0 0.0
    %684 = vmatpush.xpose.msra.mxu0 %v667
    %685 = vmatmul.f32.gmra.mxu0 %v665
    %v686 = vpop.f32.mrf.mxu0
    %v687 = vadd.f32 0.0, %v686
    %688 = vdwg.mxu0
    %v689 = vmul.f32 %v687, 0.35355338
    %v690 = vsel %vm638, 1, 0
    %v691 = vperm.slane %v690, 0
    %vm692 = vcmp.eq.s32.totalorder %v691, 1
    %v693 = vsel %vm692, -1e+09, %v689
    %v694 = vsel %vm154, %v693, -inf
    %695 = vmax.xlane.f32.xlu0 %v694
    %v696 = vpop.xlane.xlu0 %695
    %v697 = vsub.f32 %v693, %v696
    %v698 = vmul.f32 %v697, 1.442695
    %v699 = vpow.pop %v698
    %v700 = vsel %vm154, %v699, 0.0
    %701 = vadd.xlane.f32.xlu0 %v700
    %v702 = vpop.xlane.xlu0 %701
    %v703 = vrcp.pop %v702
    %v704 = vmul.f32 %v699, %v703
    %705 = vrot.lane.b32.xlu0 %v660, 64
    %v706 = vpop.permute.xlu0 %705
    %v709 = vsel %vm154, %v704, 0
    %711 = vmatpush.msra.mxu0 0.0
    %712 = vmatpush.msra.mxu0 0.0
    %713 = vmatpush.msra.mxu0 0.0
    %714 = vmatpush.msra.mxu0 0.0
    %715 = vmatpush.msra.mxu0 0.0
    %716 = vmatpush.msra.mxu0 0.0
    %717 = vmatpush.msra.mxu0 0.0
    %718 = vmatpush.msra.mxu0 0.0
    %719 = vmatpush.msra.mxu0 0.0
    %720 = vmatpush.msra.mxu0 0.0
    %721 = vmatpush.msra.mxu0 0.0
    %722 = vmatpush.msra.mxu0 0.0
    %723 = vmatpush.msra.mxu0 0.0
    %724 = vmatpush.msra.mxu0 0.0
    %725 = vmatpush.msra.mxu0 0.0
    %726 = vmatpush.msra.mxu0 %v706
    %727 = vmatmul.f32.gmra.mxu0 %v709
    %v728 = vpop.f32.mrf.mxu0
    %v729 = vadd.f32 0.0, %v728
    %730 = vdwg.mxu0
    %731 = vrot.lane.b32.xlu0 %v660, 120
    %v732 = vpop.permute.xlu0 %731
    %733 = vrot.lane.b32.xlu0 %v660, 88
    %v734 = vpop.permute.xlu0 %733
    %v735 = vsel %vm154, %v732, 0
    %v737 = vsel %vm154, %v734, 0
    %739 = vmatpush.xpose.msra.mxu0 0.0
    %740 = vmatpush.xpose.msra.mxu0 0.0
    %741 = vmatpush.xpose.msra.mxu0 0.0
    %742 = vmatpush.xpose.msra.mxu0 0.0
    %743 = vmatpush.xpose.msra.mxu0 0.0
    %744 = vmatpush.xpose.msra.mxu0 0.0
    %745 = vmatpush.xpose.msra.mxu0 0.0
    %746 = vmatpush.xpose.msra.mxu0 0.0
    %747 = vmatpush.xpose.msra.mxu0 0.0
    %748 = vmatpush.xpose.msra.mxu0 0.0
    %749 = vmatpush.xpose.msra.mxu0 0.0
    %750 = vmatpush.xpose.msra.mxu0 0.0
    %751 = vmatpush.xpose.msra.mxu0 0.0
    %752 = vmatpush.xpose.msra.mxu0 0.0
    %753 = vmatpush.xpose.msra.mxu0 0.0
    %754 = vmatpush.xpose.msra.mxu0 %v737
    %755 = vmatmul.f32.gmra.mxu0 %v735
    %v756 = vpop.f32.mrf.mxu0
    %v757 = vadd.f32 0.0, %v756
    %758 = vdwg.mxu0
    %v759 = vmul.f32 %v757, 0.35355338
    %v760 = vsel %vm692, -1e+09, %v759
    %v761 = vsel %vm154, %v760, -inf
    %762 = vmax.xlane.f32.xlu0 %v761
    %v763 = vpop.xlane.xlu0 %762
    %v764 = vsub.f32 %v760, %v763
    %v765 = vmul.f32 %v764, 1.442695
    %v766 = vpow.pop %v765
    %v767 = vsel %vm154, %v766, 0.0
    %768 = vadd.xlane.f32.xlu0 %v767
    %v769 = vpop.xlane.xlu0 %768
    %v770 = vrcp.pop %v769
    %v771 = vmul.f32 %v766, %v770
    %772 = vrot.lane.b32.xlu0 %v660, 56
    %v773 = vpop.permute.xlu0 %772
    %v776 = vsel %vm154, %v771, 0
    %778 = vmatpush.msra.mxu0 0.0
    %779 = vmatpush.msra.mxu0 0.0
    %780 = vmatpush.msra.mxu0 0.0
    %781 = vmatpush.msra.mxu0 0.0
    %782 = vmatpush.msra.mxu0 0.0
    %783 = vmatpush.msra.mxu0 0.0
    %784 = vmatpush.msra.mxu0 0.0
    %785 = vmatpush.msra.mxu0 0.0
    %786 = vmatpush.msra.mxu0 0.0
    %787 = vmatpush.msra.mxu0 0.0
    %788 = vmatpush.msra.mxu0 0.0
    %789 = vmatpush.msra.mxu0 0.0
    %790 = vmatpush.msra.mxu0 0.0
    %791 = vmatpush.msra.mxu0 0.0
    %792 = vmatpush.msra.mxu0 0.0
    %793 = vmatpush.msra.mxu0 %v773
    %794 = vmatmul.f32.gmra.mxu0 %v776
    %v795 = vpop.f32.mrf.mxu0
    %v796 = vadd.f32 0.0, %v795
    %797 = vdwg.mxu0
    %v799 = vsel %vm154, %v796, 0
    %801 = vmatpush.msra.mxu0 0.0
    %802 = vmatpush.msra.mxu0 0.0
    %803 = vmatpush.msra.mxu0 0.0
    %804 = vmatpush.msra.mxu0 0.0
    %805 = vmatpush.msra.mxu0 0.0
    %806 = vmatpush.msra.mxu0 0.0
    %807 = vmatpush.msra.mxu0 0.0
    %808 = vmatpush.msra.mxu0 0.0
    %809 = vmatpush.msra.mxu0 0.0
    %810 = vmatpush.msra.mxu0 0.0
    %811 = vmatpush.msra.mxu0 0.0
    %812 = vmatpush.msra.mxu0 0.0
    %813 = vmatpush.msra.mxu0 0.0
    %814 = vmatpush.msra.mxu0 0.0
    %815 = vmatpush.msra.mxu0 0.0
    %816 = vmatpush.msra.mxu0 %v102
    %817 = vmatmul.f32.gmra.mxu0 %v799
    %v818 = vpop.f32.mrf.mxu0
    %v819 = vadd.f32 0.0, %v818
    %820 = vdwg.mxu0
    %v822 = vsel %vm154, %v729, 0
    %824 = vmatpush.msra.mxu0 0.0
    %825 = vmatpush.msra.mxu0 0.0
    %826 = vmatpush.msra.mxu0 0.0
    %827 = vmatpush.msra.mxu0 0.0
    %828 = vmatpush.msra.mxu0 0.0
    %829 = vmatpush.msra.mxu0 0.0
    %830 = vmatpush.msra.mxu0 0.0
    %831 = vmatpush.msra.mxu0 0.0
    %832 = vmatpush.msra.mxu0 0.0
    %833 = vmatpush.msra.mxu0 0.0
    %834 = vmatpush.msra.mxu0 0.0
    %835 = vmatpush.msra.mxu0 0.0
    %836 = vmatpush.msra.mxu0 0.0
    %837 = vmatpush.msra.mxu0 0.0
    %838 = vmatpush.msra.mxu0 0.0
    %839 = vmatpush.msra.mxu0 %v101
    %840 = vmatmul.f32.gmra.mxu0 %v822
    %v841 = vpop.f32.mrf.mxu0
    %v842 = vadd.f32 %v819, %v841
    %843 = vdwg.mxu0
    %844 = vrot.lane.b32.xlu0 %v660, 112
    %v845 = vpop.permute.xlu0 %844
    %846 = vrot.lane.b32.xlu0 %v660, 80
    %v847 = vpop.permute.xlu0 %846
    %v848 = vsel %vm154, %v845, 0
    %v850 = vsel %vm154, %v847, 0
    %852 = vmatpush.xpose.msra.mxu0 0.0
    %853 = vmatpush.xpose.msra.mxu0 0.0
    %854 = vmatpush.xpose.msra.mxu0 0.0
    %855 = vmatpush.xpose.msra.mxu0 0.0
    %856 = vmatpush.xpose.msra.mxu0 0.0
    %857 = vmatpush.xpose.msra.mxu0 0.0
    %858 = vmatpush.xpose.msra.mxu0 0.0
    %859 = vmatpush.xpose.msra.mxu0 0.0
    %860 = vmatpush.xpose.msra.mxu0 0.0
    %861 = vmatpush.xpose.msra.mxu0 0.0
    %862 = vmatpush.xpose.msra.mxu0 0.0
    %863 = vmatpush.xpose.msra.mxu0 0.0
    %864 = vmatpush.xpose.msra.mxu0 0.0
    %865 = vmatpush.xpose.msra.mxu0 0.0
    %866 = vmatpush.xpose.msra.mxu0 0.0
    %867 = vmatpush.xpose.msra.mxu0 %v850
    %868 = vmatmul.f32.gmra.mxu0 %v848
    %v869 = vpop.f32.mrf.mxu0
    %v870 = vadd.f32 0.0, %v869
    %871 = vdwg.mxu0
    %v872 = vmul.f32 %v870, 0.35355338
    %v873 = vsel %vm692, -1e+09, %v872
    %v874 = vsel %vm154, %v873, -inf
    %875 = vmax.xlane.f32.xlu0 %v874
    %v876 = vpop.xlane.xlu0 %875
    %v877 = vsub.f32 %v873, %v876
    %v878 = vmul.f32 %v877, 1.442695
    %v879 = vpow.pop %v878
    %v880 = vsel %vm154, %v879, 0.0
    %881 = vadd.xlane.f32.xlu0 %v880
    %v882 = vpop.xlane.xlu0 %881
    %v883 = vrcp.pop %v882
    %v884 = vmul.f32 %v879, %v883
    %885 = vrot.lane.b32.xlu0 %v660, 48
    %v886 = vpop.permute.xlu0 %885
    %v889 = vsel %vm154, %v884, 0
    %891 = vmatpush.msra.mxu0 0.0
    %892 = vmatpush.msra.mxu0 0.0
    %893 = vmatpush.msra.mxu0 0.0
    %894 = vmatpush.msra.mxu0 0.0
    %895 = vmatpush.msra.mxu0 0.0
    %896 = vmatpush.msra.mxu0 0.0
    %897 = vmatpush.msra.mxu0 0.0
    %898 = vmatpush.msra.mxu0 0.0
    %899 = vmatpush.msra.mxu0 0.0
    %900 = vmatpush.msra.mxu0 0.0
    %901 = vmatpush.msra.mxu0 0.0
    %902 = vmatpush.msra.mxu0 0.0
    %903 = vmatpush.msra.mxu0 0.0
    %904 = vmatpush.msra.mxu0 0.0
    %905 = vmatpush.msra.mxu0 0.0
    %906 = vmatpush.msra.mxu0 %v886
    %907 = vmatmul.f32.gmra.mxu0 %v889
    %v908 = vpop.f32.mrf.mxu0
    %v909 = vadd.f32 0.0, %v908
    %910 = vdwg.mxu0
    %v912 = vsel %vm154, %v909, 0
    %914 = vmatpush.msra.mxu0 0.0
    %915 = vmatpush.msra.mxu0 0.0
    %916 = vmatpush.msra.mxu0 0.0
    %917 = vmatpush.msra.mxu0 0.0
    %918 = vmatpush.msra.mxu0 0.0
    %919 = vmatpush.msra.mxu0 0.0
    %920 = vmatpush.msra.mxu0 0.0
    %921 = vmatpush.msra.mxu0 0.0
    %922 = vmatpush.msra.mxu0 0.0
    %923 = vmatpush.msra.mxu0 0.0
    %924 = vmatpush.msra.mxu0 0.0
    %925 = vmatpush.msra.mxu0 0.0
    %926 = vmatpush.msra.mxu0 0.0
    %927 = vmatpush.msra.mxu0 0.0
    %928 = vmatpush.msra.mxu0 0.0
    %929 = vmatpush.msra.mxu0 %v103
    %930 = vmatmul.f32.gmra.mxu0 %v912
    %v931 = vpop.f32.mrf.mxu0
    %v932 = vadd.f32 0.0, %v931
    %933 = vdwg.mxu0
    %v934 = vadd.f32 %v842, %v932
    %935 = vrot.lane.b32.xlu0 %v660, 104
    %v936 = vpop.permute.xlu0 %935
    %937 = vrot.lane.b32.xlu0 %v660, 72
    %v938 = vpop.permute.xlu0 %937
    %v939 = vsel %vm154, %v936, 0
    %v941 = vsel %vm154, %v938, 0
    %943 = vmatpush.xpose.msra.mxu0 0.0
    %944 = vmatpush.xpose.msra.mxu0 0.0
    %945 = vmatpush.xpose.msra.mxu0 0.0
    %946 = vmatpush.xpose.msra.mxu0 0.0
    %947 = vmatpush.xpose.msra.mxu0 0.0
    %948 = vmatpush.xpose.msra.mxu0 0.0
    %949 = vmatpush.xpose.msra.mxu0 0.0
    %950 = vmatpush.xpose.msra.mxu0 0.0
    %951 = vmatpush.xpose.msra.mxu0 0.0
    %952 = vmatpush.xpose.msra.mxu0 0.0
    %953 = vmatpush.xpose.msra.mxu0 0.0
    %954 = vmatpush.xpose.msra.mxu0 0.0
    %955 = vmatpush.xpose.msra.mxu0 0.0
    %956 = vmatpush.xpose.msra.mxu0 0.0
    %957 = vmatpush.xpose.msra.mxu0 0.0
    %958 = vmatpush.xpose.msra.mxu0 %v941
    %959 = vmatmul.f32.gmra.mxu0 %v939
    %v960 = vpop.f32.mrf.mxu0
    %v961 = vadd.f32 0.0, %v960
    %962 = vdwg.mxu0
    %v963 = vmul.f32 %v961, 0.35355338
    %v964 = vsel %vm692, -1e+09, %v963
    %v965 = vsel %vm154, %v964, -inf
    %966 = vmax.xlane.f32.xlu0 %v965
    %v967 = vpop.xlane.xlu0 %966
    %v968 = vsub.f32 %v964, %v967
    %v969 = vmul.f32 %v968, 1.442695
    %v970 = vpow.pop %v969
    %v971 = vsel %vm154, %v970, 0.0
    %972 = vadd.xlane.f32.xlu0 %v971
    %v973 = vpop.xlane.xlu0 %972
    %v974 = vrcp.pop %v973
    %v975 = vmul.f32 %v970, %v974
    %976 = vrot.lane.b32.xlu0 %v660, 40
    %v977 = vpop.permute.xlu0 %976
    %v980 = vsel %vm154, %v975, 0
    %982 = vmatpush.msra.mxu0 0.0
    %983 = vmatpush.msra.mxu0 0.0
    %984 = vmatpush.msra.mxu0 0.0
    %985 = vmatpush.msra.mxu0 0.0
    %986 = vmatpush.msra.mxu0 0.0
    %987 = vmatpush.msra.mxu0 0.0
    %988 = vmatpush.msra.mxu0 0.0
    %989 = vmatpush.msra.mxu0 0.0
    %990 = vmatpush.msra.mxu0 0.0
    %991 = vmatpush.msra.mxu0 0.0
    %992 = vmatpush.msra.mxu0 0.0
    %993 = vmatpush.msra.mxu0 0.0
    %994 = vmatpush.msra.mxu0 0.0
    %995 = vmatpush.msra.mxu0 0.0
    %996 = vmatpush.msra.mxu0 0.0
    %997 = vmatpush.msra.mxu0 %v977
    %998 = vmatmul.f32.gmra.mxu0 %v980
    %v999 = vpop.f32.mrf.mxu0
    %v1000 = vadd.f32 0.0, %v999
    %1001 = vdwg.mxu0
    %v1003 = vsel %vm154, %v1000, 0
    %1005 = vmatpush.msra.mxu0 0.0
    %1006 = vmatpush.msra.mxu0 0.0
    %1007 = vmatpush.msra.mxu0 0.0
    %1008 = vmatpush.msra.mxu0 0.0
    %1009 = vmatpush.msra.mxu0 0.0
    %1010 = vmatpush.msra.mxu0 0.0
    %1011 = vmatpush.msra.mxu0 0.0
    %1012 = vmatpush.msra.mxu0 0.0
    %1013 = vmatpush.msra.mxu0 0.0
    %1014 = vmatpush.msra.mxu0 0.0
    %1015 = vmatpush.msra.mxu0 0.0
    %1016 = vmatpush.msra.mxu0 0.0
    %1017 = vmatpush.msra.mxu0 0.0
    %1018 = vmatpush.msra.mxu0 0.0
    %1019 = vmatpush.msra.mxu0 0.0
    %1020 = vmatpush.msra.mxu0 %v104
    %1021 = vmatmul.f32.gmra.mxu0 %v1003
    %v1022 = vpop.f32.mrf.mxu0
    %v1023 = vadd.f32 0.0, %v1022
    %1024 = vdwg.mxu0
    %v1025 = vadd.f32 %v934, %v1023
    %v1026 = vadd.f32 %v1025, %v516
    %v1027 = vadd.f32 %v635, %v1026
    %v1028 = vsel %vm127, %v1027, 0.0
    %1029 = vadd.xlane.f32.xlu0 %v1028
    %v1030 = vpop.xlane.xlu0 %1029
    %v1031 = vmul.f32 %v1030, %v528
    %v1032 = vsub.f32 %v1027, %v1031
    %v1033 = vmul.f32 %v1032, %v1032
    %v1034 = vsel %vm127, %v1033, 0.0
    %1035 = vadd.xlane.f32.xlu0 %v1034
    %v1036 = vpop.xlane.xlu0 %1035
    %v1037 = vmul.f32 %v1036, %v528
    %v1038 = vadd.f32 %v1037, 1e-05
    %v1039 = vrsqrt.pop %v1038
    %v1040 = vmul.f32 %v1039, %v1038
    %v1041 = vmul.f32 %v1040, %v1039
    %v1042 = vmul.f32 0.5, %v1041
    %v1043 = vsub.f32 1.5, %v1042
    %v1044 = vmul.f32 %v1039, %v1043
    %vm1045 = vweird.f32 %v1038
    %vm1046 = vweird.f32 %v1039
    %vm1047 = vmor %vm1045, %vm1046
    %v1048 = vsel %vm1047, %v1039, %v1044
    %v1049 = vmul.f32 %v1032, %v1048
    %v1050 = vmul.f32 %v1049, %v548
    %v1051 = vadd.f32 %v1050, %v550
    %v1053 = vsel %vm127, %v1051, 0
    %1055 = vmatpush.msra.mxu0 0.0
    %1056 = vmatpush.msra.mxu0 0.0
    %1057 = vmatpush.msra.mxu0 0.0
    %1058 = vmatpush.msra.mxu0 0.0
    %1059 = vmatpush.msra.mxu0 0.0
    %1060 = vmatpush.msra.mxu0 0.0
    %1061 = vmatpush.msra.mxu0 0.0
    %1062 = vmatpush.msra.mxu0 0.0
    %1063 = vmatpush.msra.mxu0 0.0
    %1064 = vmatpush.msra.mxu0 0.0
    %1065 = vmatpush.msra.mxu0 0.0
    %1066 = vmatpush.msra.mxu0 0.0
    %1067 = vmatpush.msra.mxu0 %v108
    %1068 = vmatpush.msra.mxu0 %v107
    %1069 = vmatpush.msra.mxu0 %v106
    %1070 = vmatpush.msra.mxu0 %v105
    %1071 = vmatmul.f32.gmra.mxu0 %v1053
    %v1072 = vpop.f32.mrf.mxu0
    %v1073 = vadd.f32 %v553, %v1072
    %1074 = vdwg.mxu0
    %v1075 = vmax.f32 %v1073, 0.0
    %v1077 = vsel %vm580, %v1075, 0
    %1079 = vmatpush.msra.mxu0 0.0
    %1080 = vmatpush.msra.mxu0 0.0
    %1081 = vmatpush.msra.mxu0 0.0
    %1082 = vmatpush.msra.mxu0 0.0
    %1083 = vmatpush.msra.mxu0 0.0
    %1084 = vmatpush.msra.mxu0 0.0
    %1085 = vmatpush.msra.mxu0 0.0
    %1086 = vmatpush.msra.mxu0 0.0
    %1087 = vmatpush.msra.mxu0 %v117
    %1088 = vmatpush.msra.mxu0 %v116
    %1089 = vmatpush.msra.mxu0 %v115
    %1090 = vmatpush.msra.mxu0 %v114
    %1091 = vmatpush.msra.mxu0 %v113
    %1092 = vmatpush.msra.mxu0 %v112
    %1093 = vmatpush.msra.mxu0 %v111
    %1094 = vmatpush.msra.mxu0 %v110
    %1095 = vmatmul.f32.gmra.mxu0 %v1077
    %v1096 = vpop.f32.mrf.mxu0
    %v1097 = vadd.f32 %v579, %v1096
    %1098 = vdwg.mxu0
    %v1099 = vadd.f32 %v1051, %v1097
    %v1100 = vsel %vm127, %v1099, 0.0
    %1101 = vadd.xlane.f32.xlu0 %v1100
    %v1102 = vpop.xlane.xlu0 %1101
    %v1103 = vmul.f32 %v1102, %v528
    %v1104 = vsub.f32 %v1099, %v1103
    %v1105 = vmul.f32 %v1104, %v1104
    %v1106 = vsel %vm127, %v1105, 0.0
    %1107 = vadd.xlane.f32.xlu0 %v1106
    %v1108 = vpop.xlane.xlu0 %1107
    %v1109 = vmul.f32 %v1108, %v528
    %v1110 = vadd.f32 %v1109, 1e-05
    %v1111 = vrsqrt.pop %v1110
    %v1112 = vmul.f32 %v1111, %v1110
    %v1113 = vmul.f32 %v1112, %v1111
    %v1114 = vmul.f32 0.5, %v1113
    %v1115 = vsub.f32 1.5, %v1114
    %v1116 = vmul.f32 %v1111, %v1115
    %vm1117 = vweird.f32 %v1110
    %vm1118 = vweird.f32 %v1111
    %vm1119 = vmor %vm1117, %vm1118
    %v1120 = vsel %vm1119, %v1111, %v1116
    %v1121 = vmul.f32 %v1104, %v1120
    %v1122 = vmul.f32 %v1121, %v627
    %v1123 = vadd.f32 %v1122, %v629
    %s1124 = scalar_lea.vmem [#allocation10], 8
    %1125 = vst.msk [vmem:[%s1124] sm:$0xff] %vm127, %v1123
    // Predicated region
    $region58: #{tpu_custom_call.1} parent=1 // pred_check
      _
    $region59: #{tpu_custom_call.1} parent=1 // pred_check_branch
      %1127 = sbr.rel (0) target = $region61
    $region60: #{tpu_custom_call.1} parent=1 // pred_region
      %1129 = vsyncadd [#allocation4], 0
      %s1130 = sshll.u32 [#allocation10], 4
      %s1131 = int_to_ptr.vmem [resolvable:$true] %s1130
      %s1132 = sshll.u32 %s10, 4
      %s1133 = int_to_ptr.hbm [resolvable:$true] %s1132
      %1138 = dma.vmem_to_hbm [thread:$0]  %s1131, 256, %s1133, [#allocation4], 128, 128, 8
    $region61: #{tpu_custom_call.1} parent=1 // pred_fallthru
      _
    // Predicated region
    $region62: #{tpu_custom_call.1} parent=1 // pred_check
      _
    $region63: #{tpu_custom_call.1} parent=1 // pred_check_branch
      %1140 = sbr.rel (0) target = $region65
    $region64: #{tpu_custom_call.1} parent=1 // pred_region
      %1142 = dma.done [#allocation4], 256
    $region65: #{tpu_custom_call.1} parent=1 // pred_fallthru
      _
    %1143 = vsyncpa [#allocation3], 1
    %1144 = vsyncpa [#allocation6], 1
    %1145 = vsyncpa [#allocation9], 1
    %1146 = vsyncpa [#allocation4], 1

</llo_original>
